<compile_context>
chip_gen: v5e
topology: v5e:2x2
jax: 0.10.0
libtpu: 0.0.40
codegen_flags: <defaults>
</compile_context>

<pallas_src>
import math

import jax
import jax.numpy as jnp
from jax.experimental import pallas as pl
from jax.experimental.pallas import tpu as pltpu


def _gelu_exact_f32(x):
    # BERT gelu: x * 0.5 * (1 + erf(x / sqrt(2)))  -- exact erf form, computed in f32.
    return x * 0.5 * (1.0 + jax.lax.erf(x * (1.0 / math.sqrt(2.0))))


def bert_intermediate_kernel(x_ref, w_ref, b_ref, o_ref):
    # x_ref: (tm, H) bf16   w_ref: (H, tn) bf16   b_ref: (1, tn) f32   o_ref: (tm, tn)
    acc = jnp.dot(x_ref[...], w_ref[...], preferred_element_type=jnp.float32)
    acc = acc + b_ref[...]                      # bias add in f32
    o_ref[...] = _gelu_exact_f32(acc).astype(o_ref.dtype)


def bert_intermediate(hidden_states, w, b, *, tm=128, tn=256):
    """hidden_states: (B, S, H) f32, w: (H, I) (nn.Linear weight pre-transposed to
    [in, out]), b: (I,).  Returns gelu(hidden_states @ w + b): (B, S, I)."""
    B, S, H = hidden_states.shape
    I = w.shape[1]
    M = B * S

    tm = min(tm, M)
    tn = min(tn, I)
    assert M % tm == 0 and I % tn == 0, "test shapes must tile evenly"

    # bf16 operands for the MXU; accumulation happens in f32 inside the kernel.
    x2 = hidden_states.reshape(M, H).astype(jnp.bfloat16)
    w2 = w.astype(jnp.bfloat16)
    b2 = b.reshape(1, I).astype(jnp.float32)

    out = pl.pallas_call(
        bert_intermediate_kernel,
        out_shape=jax.ShapeDtypeStruct((M, I), hidden_states.dtype),
        grid_spec=pltpu.PrefetchScalarGridSpec(
            num_scalar_prefetch=0,
            grid=(M // tm, I // tn),
            in_specs=[
                pl.BlockSpec((tm, H), lambda i, j: (i, 0)),   # activations row tile
                pl.BlockSpec((H, tn), lambda i, j: (0, j)),   # weight column tile
                pl.BlockSpec((1, tn), lambda i, j: (0, j)),   # bias column tile
            ],
            out_specs=pl.BlockSpec((tm, tn), lambda i, j: (i, j)),
        ),
        compiler_params=pltpu.CompilerParams(
            dimension_semantics=("parallel", "parallel"),
            vmem_limit_bytes=48 * 1024 * 1024,   # generation-safe (< v7x 64 MiB physical)
        ),
    )(x2, w2, b2)

    return out.reshape(B, S, I)


def bert_intermediate_ref(hidden_states, w, b):
    # Pure-JAX reference mirroring the PyTorch forward (f32 throughout).
    h = hidden_states @ w + b
    return _gelu_exact_f32(h)


if __name__ == "__main__":
    # Small but (8,128)-aligned shapes; module defaults are H=768, I=3072 (4x ratio kept).
    B, S, H, I = 2, 64, 256, 512

    root = jax.random.PRNGKey(0)
    kx, kw, kb = jax.random.split(root, 3)

    x = jax.random.normal(kx, (B, S, H), jnp.float32)
    w = 0.02 * jax.random.normal(kw, (H, I), jnp.float32)   # Linear weight, (in, out)
    b = 0.01 * jax.random.normal(kb, (I,), jnp.float32)

    out = bert_intermediate(x, w, b)
    out = jax.block_until_ready(out)

    ref = bert_intermediate_ref(x, w, b)
    assert out.shape == (B, S, I)
    # bf16 MXU operands with f32 accumulation => loosened tolerance vs f32 reference.
    assert jnp.allclose(out, ref, atol=2e-2, rtol=2e-2), "mismatch vs reference"

    print("KERNEL_OK")
</pallas_src>

<mosaic_0001>
module attributes {stable_mosaic.version = 11 : i64} {
  func.func @bert_intermediate_kernel(%arg0: i32, %arg1: i32, %arg2: memref<128x256xbf16, #tpu.memory_space<vmem>>, %arg3: memref<256x256xbf16, #tpu.memory_space<vmem>>, %arg4: memref<1x256xf32, #tpu.memory_space<vmem>>, %arg5: memref<128x256xf32, #tpu.memory_space<vmem>>) attributes {dimension_semantics = [#tpu.dimension_semantics<parallel>, #tpu.dimension_semantics<parallel>], iteration_bounds = array<i64: 1, 2>, scalar_prefetch = 0 : i64, scratch_operands = 0 : i64, tpu.core_type = #tpu.core_type<tc>, window_params = [{transform_indices = @transform_0, window_bounds = array<i64: 128, 256>}, {transform_indices = @transform_1, window_bounds = array<i64: 256, 256>}, {transform_indices = @transform_2, window_bounds = array<i64: 1, 256>}, {transform_indices = @transform_3, window_bounds = array<i64: 128, 256>}]} {
    %c0 = arith.constant 0 : index
    %c0_0 = arith.constant 0 : index
    %0 = vector.load %arg2[%c0, %c0_0] : memref<128x256xbf16, #tpu.memory_space<vmem>>, vector<128x256xbf16>
    %c0_1 = arith.constant 0 : index
    %c0_2 = arith.constant 0 : index
    %1 = vector.load %arg3[%c0_1, %c0_2] : memref<256x256xbf16, #tpu.memory_space<vmem>>, vector<256x256xbf16>
    %cst = arith.constant dense<0.000000e+00> : vector<128x256xf32>
    %2 = tpu.matmul %0, %1, %cst {dimension_numbers = #tpu.dot_dimension_numbers<[1], [0], [0], [1], [0, 0, 1, 1], [], []>} : vector<128x256xbf16>, vector<256x256xbf16>, vector<128x256xf32> -> vector<128x256xf32>
    %c0_3 = arith.constant 0 : index
    %c0_4 = arith.constant 0 : index
    %3 = vector.load %arg4[%c0_3, %c0_4] : memref<1x256xf32, #tpu.memory_space<vmem>>, vector<1x256xf32>
    %4 = vector.broadcast %3 : vector<1x256xf32> to vector<128x256xf32>
    %5 = arith.addf %2, %4 : vector<128x256xf32>
    %cst_5 = arith.constant 5.000000e-01 : f32
    %6 = vector.broadcast %cst_5 : f32 to vector<128x256xf32>
    %7 = arith.mulf %5, %6 : vector<128x256xf32>
    %cst_6 = arith.constant 0.707106769 : f32
    %8 = vector.broadcast %cst_6 : f32 to vector<128x256xf32>
    %9 = arith.mulf %5, %8 : vector<128x256xf32>
    %10 = math.erf %9 : vector<128x256xf32>
    %cst_7 = arith.constant 1.000000e+00 : f32
    %11 = vector.broadcast %cst_7 : f32 to vector<128x256xf32>
    %12 = arith.addf %11, %10 : vector<128x256xf32>
    %13 = arith.mulf %7, %12 : vector<128x256xf32>
    %c0_8 = arith.constant 0 : index
    %c0_9 = arith.constant 0 : index
    %14 = vector.load %arg5[%c0_8, %c0_9] : memref<128x256xf32, #tpu.memory_space<vmem>>, vector<128x256xf32>
    tpu.vector_store %arg5[%c0_8, %c0_9], %13 {strides = array<i32>} : memref<128x256xf32, #tpu.memory_space<vmem>>, vector<128x256xf32>,
    return
  }
  func.func @transform_0(%arg0: i32, %arg1: i32) -> (i32, i32) {
    %c0_i32 = arith.constant 0 : i32
    %c0_i32_0 = arith.constant 0 : i32
    return %arg0, %c0_i32 : i32, i32
  }
  func.func @transform_1(%arg0: i32, %arg1: i32) -> (i32, i32) {
    %c0_i32 = arith.constant 0 : i32
    %c0_i32_0 = arith.constant 0 : i32
    return %c0_i32, %arg1 : i32, i32
  }
  func.func @transform_2(%arg0: i32, %arg1: i32) -> (i32, i32) {
    %c0_i32 = arith.constant 0 : i32
    %c0_i32_0 = arith.constant 0 : i32
    return %c0_i32, %arg1 : i32, i32
  }
  func.func @transform_3(%arg0: i32, %arg1: i32) -> (i32, i32) {
    %c0_i32 = arith.constant 0 : i32
    return %arg0, %arg1 : i32, i32
  }
}

</mosaic_0001>

<llo_original>
// kernel: tpu_custom_call.1
$region0: #{tpu_custom_call.1}
  #allocation0 [shape = 'u32[]', space=smem, size = 0x4, offset = 0x4, fixed_abs, tag = 'smem constant byte address 0x4 - core index']
  #allocation1 [shape = 'u32[72,128]{1,0:T(1,128)}', space=vmem, size = 0x9000, scoped, tag = 'internal scratch']
  %s0 = inlined_call_operand.hbm [shape: bf16[128,256], index: 0, kind: input, shape index: {}]
  %s1 = inlined_call_operand.hbm [shape: bf16[256,512], index: 1, kind: input, shape index: {}]
  %s2 = inlined_call_operand.hbm [shape: f32[1,512], index: 2, kind: input, shape index: {}]
  %s3 = inlined_call_operand.hbm [shape: f32[128,512], index: 3, kind: output, shape index: {}]
  %s4 = sld [smem:[#allocation0]]
  $region57: #{tpu_custom_call.1} parent=0
    _
  %s6 = ssub.s32 1, %s4
  %s7 = scalar_select 0, %s6, %s4
  $region1: #{tpu_custom_call.1} parent=0
    #allocation2 [shape = 'u8[65536]{0}', space=vmem, size = 0x10000, scoped, tag = 'input window, operand 0, single buffered']
    #allocation3 [shape = 's32[2]{0}', space=sflag, size = 0x8, scoped, tag = 'scoped memory for tpu_custom_call.1']
    #allocation4 [shape = 's32[2]{0}', space=sflag, size = 0x8, scoped, tag = 'scoped memory for tpu_custom_call.1']
    #allocation5 [shape = 'u8[262144]{0}', space=vmem, size = 0x40000, scoped, tag = 'input window, operand 1']
    #allocation6 [shape = 's32[2]{0}', space=sflag, size = 0x8, scoped, tag = 'scoped memory for tpu_custom_call.1']
    #allocation7 [shape = 'u8[2048]{0}', space=vmem, size = 0x800, scoped, tag = 'input window, operand 2']
    #allocation8 [shape = 'u8[262144]{0}', space=vmem, size = 0x40000, scoped, tag = 'output window, operand 0']
    %8 = vsyncpa [#allocation3], 0
    %9 = vsyncpa [#allocation6], 0
    %s10 = scalar_lea.sflag [#allocation6], 1
    %11 = vsyncpa %s10, 0
    %12 = vsyncpa [#allocation4], 0
    %s13 = scalar_lea.sflag [#allocation4], 1
    %14 = vsyncpa %s13, 0
    loop: start=0, step=1, limit=4
    $region2: #{tpu_custom_call.1} parent=1 // loop_pre_header
      _
    $region3: #{tpu_custom_call.1} parent=1 // loop_header
      %s16 = sphi 0, %s20
      %p17 = scmp.ge.s32.totalorder %s16, 4
      %s23 = sphi 0, %s35
      %s24 = sphi 0, %s31
      %s25 = sphi 0, %s23
      %s26 = sphi 0, %s24
      %s27 = sphi 0, %s25
      %s28 = sphi 0, %s26
      %s38 = sphi 0, %s40
      %s41 = sphi 0, %s38
      %s42 = sphi 0, %s41
      %s58 = sphi 0, %s42
      %s64 = sphi 0, %s66
      %s67 = sphi 0, %s64
      %s68 = sphi 0, %s67
      %s84 = sphi 0, %s68
      %s90 = sphi 0, %s92
      %s93 = sphi 0, %s90
      %s94 = sphi 0, %s93
      %s110 = sphi 0, %s94
      %s118 = sphi 0, %s120
      %s121 = sphi 0, %s118
      %s122 = sphi 0, %s121
      %s138 = sphi 0, %s122
    $region4: #{tpu_custom_call.1} parent=1 // loop_header_branch
      %19 = sbr.rel (%p17) target = $region8
    $region5: #{tpu_custom_call.1} parent=1 // loop_body
      %s21 = ssub.s32 %s16, 1
      %s22 = ssub.s32 %s16, 2
      %s29 = sadd.s32 1, %s24
      %p30 = scmp.ge.s32.totalorder %s29, 2
      %s31 = scalar_select %p30, 0, %s29
      %s32 = sadd.s32 1, %s23
      %s33 = scalar_select %p30, %s32, %s23
      %p34 = scmp.ge.s32.totalorder %s33, 1
      %s35 = scalar_select %p34, 0, %s33
      %s36 = ssub.s32 %s23, %s35
      %p37 = scmp.eq.s32.totalorder %s36, 0
      %s39 = sadd.s32 %s38, 1
      %s40 = scalar_select %p37, %s38, %s39
      %p43 = pneg %p37
      %p44 = scmp.eq.s32.totalorder %s16, 1
      %p45 = por %p43, %p44
      %p46 = scmp.ne.s32.totalorder %s38, %s41
      %p47 = scmp.eq.s32.totalorder %s16, 0
      %p48 = por %p46, %p47
      %p49 = scmp.ne.s32.totalorder %s38, %s41
      %p50 = scmp.eq.s32.totalorder %s21, 1
      %p51 = por %p49, %p50
      %p52 = scmp.ne.s32.totalorder %s41, %s42
      %p53 = scmp.eq.s32.totalorder %s21, 0
      %p54 = por %p52, %p53
      %p55 = scmp.ne.s32.totalorder %s41, %s42
      %p56 = scmp.eq.s32.totalorder %s22, 1
      %p57 = por %p55, %p56
      %p59 = scmp.ne.s32.totalorder %s42, %s58
      %p60 = scmp.eq.s32.totalorder %s22, 0
      %p61 = por %p59, %p60
      %s62 = ssub.s32 %s24, %s31
      %p63 = scmp.eq.s32.totalorder %s62, 0
      %s65 = sadd.s32 %s64, 1
      %s66 = scalar_select %p63, %s64, %s65
      %p69 = pneg %p63
      %p70 = scmp.eq.s32.totalorder %s16, 1
      %p71 = por %p69, %p70
      %p72 = scmp.ne.s32.totalorder %s64, %s67
      %p73 = scmp.eq.s32.totalorder %s16, 0
      %p74 = por %p72, %p73
      %p75 = scmp.ne.s32.totalorder %s64, %s67
      %p76 = scmp.eq.s32.totalorder %s21, 1
      %p77 = por %p75, %p76
      %p78 = scmp.ne.s32.totalorder %s67, %s68
      %p79 = scmp.eq.s32.totalorder %s21, 0
      %p80 = por %p78, %p79
      %p81 = scmp.ne.s32.totalorder %s67, %s68
      %p82 = scmp.eq.s32.totalorder %s22, 1
      %p83 = por %p81, %p82
      %p85 = scmp.ne.s32.totalorder %s68, %s84
      %p86 = scmp.eq.s32.totalorder %s22, 0
      %p87 = por %p85, %p86
      %s88 = ssub.s32 %s24, %s31
      %p89 = scmp.eq.s32.totalorder %s88, 0
      %s91 = sadd.s32 %s90, 1
      %s92 = scalar_select %p89, %s90, %s91
      %p95 = pneg %p89
      %p96 = scmp.eq.s32.totalorder %s16, 1
      %p97 = por %p95, %p96
      %p98 = scmp.ne.s32.totalorder %s90, %s93
      %p99 = scmp.eq.s32.totalorder %s16, 0
      %p100 = por %p98, %p99
      %p101 = scmp.ne.s32.totalorder %s90, %s93
      %p102 = scmp.eq.s32.totalorder %s21, 1
      %p103 = por %p101, %p102
      %p104 = scmp.ne.s32.totalorder %s93, %s94
      %p105 = scmp.eq.s32.totalorder %s21, 0
      %p106 = por %p104, %p105
      %p107 = scmp.ne.s32.totalorder %s93, %s94
      %p108 = scmp.eq.s32.totalorder %s22, 1
      %p109 = por %p107, %p108
      %p111 = scmp.ne.s32.totalorder %s94, %s110
      %p112 = scmp.eq.s32.totalorder %s22, 0
      %p113 = por %p111, %p112
      %s114 = ssub.s32 %s23, %s35
      %s115 = ssub.s32 %s24, %s31
      %s116 = sor.u32 %s114, %s115
      %p117 = scmp.eq.s32.totalorder %s116, 0
      %s119 = sadd.s32 %s118, 1
      %s120 = scalar_select %p117, %s118, %s119
      %p123 = pneg %p117
      %p124 = scmp.eq.s32.totalorder %s16, 1
      %p125 = por %p123, %p124
      %p126 = scmp.ne.s32.totalorder %s118, %s121
      %p127 = scmp.eq.s32.totalorder %s16, 0
      %p128 = por %p126, %p127
      %p129 = scmp.ne.s32.totalorder %s118, %s121
      %p130 = scmp.eq.s32.totalorder %s21, 1
      %p131 = por %p129, %p130
      %p132 = scmp.ne.s32.totalorder %s121, %s122
      %p133 = scmp.eq.s32.totalorder %s21, 0
      %p134 = por %p132, %p133
      %p135 = scmp.ne.s32.totalorder %s121, %s122
      %p136 = scmp.eq.s32.totalorder %s22, 1
      %p137 = por %p135, %p136
      %p139 = scmp.ne.s32.totalorder %s122, %s138
      %p140 = scmp.eq.s32.totalorder %s22, 0
      %p141 = por %p139, %p140
      %p142 = scmp.le.s32.totalorder 1, %s16
      %p143 = scmp.lt.s32.totalorder %s16, 3
      %p144 = pnand %p142, %p143
      %p145 = pneg %p144
      // Predicated region
      $region9: #{tpu_custom_call.1} parent=5 // pred_check
        _
      $region10: #{tpu_custom_call.1} parent=5 // pred_check_branch
        %147 = sbr.rel (%p144) target = $region12
      $region11: #{tpu_custom_call.1} parent=5 // pred_region
        %s148 = ssub.s32 %s16, 1
        // Predicated region
        $region13: #{tpu_custom_call.1} parent=11 // pred_check
          %p149 = pneg %p54
        $region14: #{tpu_custom_call.1} parent=11 // pred_check_branch
          %151 = sbr.rel (%p149) target = $region16
        $region15: #{tpu_custom_call.1} parent=11 // pred_region
          %s152 = smul.u32 16, %s25
          %154 = vsyncadd [#allocation3], 0
          %s155 = smul.addr %s152, 2
          %s156 = smul.addr %s155, 4
          %s157 = scalar_lea.hbm %s0, %s156
          %s158 = sshll.u32 %s157, 4
          %s159 = int_to_ptr.hbm [resolvable:$true] %s158
          %s160 = sshll.u32 [#allocation2], 4
          %s161 = int_to_ptr.vmem [resolvable:$true] %s160
          %166 = dma.hbm_to_vmem [thread:$0]  %s159, 2048, %s161, [#allocation3], 128, 128, 8
        $region16: #{tpu_custom_call.1} parent=11 // pred_fallthru
          _
      $region12: #{tpu_custom_call.1} parent=5 // pred_fallthru
        _
      %p167 = scmp.lt.s32.totalorder %s16, 2
      // Predicated region
      $region17: #{tpu_custom_call.1} parent=5 // pred_check
        %p168 = pneg %p167
      $region18: #{tpu_custom_call.1} parent=5 // pred_check_branch
        %170 = sbr.rel (%p168) target = $region20
      $region19: #{tpu_custom_call.1} parent=5 // pred_region
        // Predicated region
        $region21: #{tpu_custom_call.1} parent=19 // pred_check
          %p171 = pneg %p74
        $region22: #{tpu_custom_call.1} parent=19 // pred_check_branch
          %173 = sbr.rel (%p171) target = $region24
        $region23: #{tpu_custom_call.1} parent=19 // pred_region
          %s174 = sand.u32 %s16, 1
          %s175 = scalar_lea.sflag [#allocation6], %s174
          %s176 = sand.u32 %s64, 1
          %s177 = smul.addr %s176, 256
          %s178 = scalar_lea.vmem [#allocation5], %s177
          %s179 = smul.u32 2, %s24
          %181 = vsyncadd %s175, 0
          %s182 = smul.addr %s179, 4
          %s183 = scalar_lea.hbm %s1, %s182
          %s184 = sshll.u32 %s183, 4
          %s185 = int_to_ptr.hbm [resolvable:$true] %s184
          %s186 = sshll.u32 %s178, 4
          %s187 = int_to_ptr.vmem [resolvable:$true] %s186
          %192 = dma.hbm_to_vmem [thread:$0]  %s185, 4096, %s187, %s175, 256, 128, 8
        $region24: #{tpu_custom_call.1} parent=19 // pred_fallthru
          _
        // Predicated region
        $region25: #{tpu_custom_call.1} parent=19 // pred_check
          %p193 = pneg %p100
        $region26: #{tpu_custom_call.1} parent=19 // pred_check_branch
          %195 = sbr.rel (%p193) target = $region28
        $region27: #{tpu_custom_call.1} parent=19 // pred_region
          %s196 = sand.u32 %s16, 1
          %s197 = scalar_lea.sflag [#allocation6], %s196
          %s198 = sand.u32 %s90, 1
          %s199 = smul.addr %s198, 2
          %s200 = scalar_lea.vmem [#allocation7], %s199
          %s201 = smul.u32 2, %s24
          %203 = vsyncadd %s197, 0
          %s204 = scalar_lea.hbm %s2, %s201
          %s206 = sshll.u32 %s204, 4
          %s207 = int_to_ptr.hbm [resolvable:$true] %s206
          %s208 = sshll.u32 %s200, 4
          %s209 = int_to_ptr.vmem [resolvable:$true] %s208
          %211 = dma.hbm_to_vmem [thread:$0]  %s207, 32, %s209, %s197
        $region28: #{tpu_custom_call.1} parent=19 // pred_fallthru
          _
      $region20: #{tpu_custom_call.1} parent=5 // pred_fallthru
        _
      %p212 = scmp.le.s32.totalorder 1, %s16
      %p213 = scmp.lt.s32.totalorder %s16, 3
      %p214 = pnand %p212, %p213
      %p215 = pneg %p214
      // Predicated region
      $region29: #{tpu_custom_call.1} parent=5 // pred_check
        _
      $region30: #{tpu_custom_call.1} parent=5 // pred_check_branch
        %217 = sbr.rel (%p214) target = $region32
      $region31: #{tpu_custom_call.1} parent=5 // pred_region
        %s218 = ssub.s32 %s16, 1
        // Predicated region
        $region33: #{tpu_custom_call.1} parent=31 // pred_check
          %p219 = pneg %p54
        $region34: #{tpu_custom_call.1} parent=31 // pred_check_branch
          %221 = sbr.rel (%p219) target = $region36
        $region35: #{tpu_custom_call.1} parent=31 // pred_region
          %223 = dma.done [#allocation3], 2048
        $region36: #{tpu_custom_call.1} parent=31 // pred_fallthru
          _
        %s224 = sand.u32 %s21, 1
        %s225 = scalar_lea.sflag [#allocation6], %s224
        %s226 = sand.u32 %s67, 1
        %s227 = smul.addr %s226, 256
        %s228 = scalar_lea.vmem [#allocation5], %s227
        // Predicated region
        $region37: #{tpu_custom_call.1} parent=31 // pred_check
          %p229 = pneg %p80
        $region38: #{tpu_custom_call.1} parent=31 // pred_check_branch
          %231 = sbr.rel (%p229) target = $region40
        $region39: #{tpu_custom_call.1} parent=31 // pred_region
          %233 = dma.done %s225, 4096
        $region40: #{tpu_custom_call.1} parent=31 // pred_fallthru
          _
        %s234 = sand.u32 %s21, 1
        %s235 = scalar_lea.sflag [#allocation6], %s234
        %s236 = sand.u32 %s93, 1
        %s237 = smul.addr %s236, 2
        %s238 = scalar_lea.vmem [#allocation7], %s237
        // Predicated region
        $region41: #{tpu_custom_call.1} parent=31 // pred_check
          %p239 = pneg %p106
        $region42: #{tpu_custom_call.1} parent=31 // pred_check_branch
          %241 = sbr.rel (%p239) target = $region44
        $region43: #{tpu_custom_call.1} parent=31 // pred_region
          %243 = dma.done %s235, 32
        $region44: #{tpu_custom_call.1} parent=31 // pred_fallthru
          _
        %p244 = pneg %p54
        %p245 = pneg %p51
        %s246 = sand.u32 %s21, 1
        %s247 = scalar_lea.sflag [#allocation6], %s246
        %s248 = sand.u32 %s67, 1
        %s249 = smul.addr %s248, 256
        %s250 = scalar_lea.vmem [#allocation5], %s249
        %p251 = pneg %p80
        %p252 = pneg %p77
        %s253 = sand.u32 %s21, 1
        %s254 = scalar_lea.sflag [#allocation6], %s253
        %s255 = sand.u32 %s93, 1
        %s256 = smul.addr %s255, 2
        %s257 = scalar_lea.vmem [#allocation7], %s256
        %p258 = pneg %p106
        %p259 = pneg %p103
        %p260 = pneg %p134
        %p261 = pneg %p131
        %s262 = sand.u32 %s121, 1
        %s263 = scalar_lea.sflag [#allocation4], %s262
        %s264 = sand.u32 %s121, 1
        %s265 = smul.addr %s264, 256
        %s266 = scalar_lea.vmem [#allocation8], %s265
        %s267 = smul.u32 16, %s25
        %s268 = smul.u32 2, %s26
        %s269 = smul.u32 2, %s26
        %s270 = smul.u32 16, %s25
        %s271 = smul.u32 2, %s26
        %v272 = vld [vmem:[#allocation2] sm:$0xff]
        %v273 = vld [vmem:[#allocation2 + $0x8] sm:$0xff]
        %v274 = vld [vmem:[#allocation2 + $0x10] sm:$0xff]
        %v275 = vld [vmem:[#allocation2 + $0x18] sm:$0xff]
        %v276 = vld [vmem:[#allocation2 + $0x20] sm:$0xff]
        %v277 = vld [vmem:[#allocation2 + $0x28] sm:$0xff]
        %v278 = vld [vmem:[#allocation2 + $0x30] sm:$0xff]
        %v279 = vld [vmem:[#allocation2 + $0x38] sm:$0xff]
        %v280 = vld [vmem:[#allocation2 + $0x40] sm:$0xff]
        %v281 = vld [vmem:[#allocation2 + $0x48] sm:$0xff]
        %v282 = vld [vmem:[#allocation2 + $0x50] sm:$0xff]
        %v283 = vld [vmem:[#allocation2 + $0x58] sm:$0xff]
        %v284 = vld [vmem:[#allocation2 + $0x60] sm:$0xff]
        %v285 = vld [vmem:[#allocation2 + $0x68] sm:$0xff]
        %v286 = vld [vmem:[#allocation2 + $0x70] sm:$0xff]
        %v287 = vld [vmem:[#allocation2 + $0x78] sm:$0xff]
        %v288 = vld [vmem:[%s228] sm:$0xff]
        %v289 = vld [vmem:[%s228 + $0x8] sm:$0xff]
        %v290 = vld [vmem:[%s228 + $0x10] sm:$0xff]
        %v291 = vld [vmem:[%s228 + $0x18] sm:$0xff]
        %v292 = vld [vmem:[%s228 + $0x20] sm:$0xff]
        %v293 = vld [vmem:[%s228 + $0x28] sm:$0xff]
        %v294 = vld [vmem:[%s228 + $0x30] sm:$0xff]
        %v295 = vld [vmem:[%s228 + $0x38] sm:$0xff]
        %v296 = vld [vmem:[%s228 + $0x40] sm:$0xff]
        %v297 = vld [vmem:[%s228 + $0x48] sm:$0xff]
        %v298 = vld [vmem:[%s228 + $0x50] sm:$0xff]
        %v299 = vld [vmem:[%s228 + $0x58] sm:$0xff]
        %v300 = vld [vmem:[%s228 + $0x60] sm:$0xff]
        %v301 = vld [vmem:[%s228 + $0x68] sm:$0xff]
        %v302 = vld [vmem:[%s228 + $0x70] sm:$0xff]
        %v303 = vld [vmem:[%s228 + $0x78] sm:$0xff]
        %v304 = vld [vmem:[%s228 + $0x80] sm:$0xff]
        %v305 = vld [vmem:[%s228 + $0x88] sm:$0xff]
        %v306 = vld [vmem:[%s228 + $0x90] sm:$0xff]
        %v307 = vld [vmem:[%s228 + $0x98] sm:$0xff]
        %v308 = vld [vmem:[%s228 + $0xa0] sm:$0xff]
        %v309 = vld [vmem:[%s228 + $0xa8] sm:$0xff]
        %v310 = vld [vmem:[%s228 + $0xb0] sm:$0xff]
        %v311 = vld [vmem:[%s228 + $0xb8] sm:$0xff]
        %v312 = vld [vmem:[%s228 + $0xc0] sm:$0xff]
        %v313 = vld [vmem:[%s228 + $0xc8] sm:$0xff]
        %v314 = vld [vmem:[%s228 + $0xd0] sm:$0xff]
        %v315 = vld [vmem:[%s228 + $0xd8] sm:$0xff]
        %v316 = vld [vmem:[%s228 + $0xe0] sm:$0xff]
        %v317 = vld [vmem:[%s228 + $0xe8] sm:$0xff]
        %v318 = vld [vmem:[%s228 + $0xf0] sm:$0xff]
        %v319 = vld [vmem:[%s228 + $0xf8] sm:$0xff]
        %v320 = vld [vmem:[%s238] sm:$0x3]
        %v322 = vperm.slane %v320, 0
        %v323 = vperm.slane %v320, 1
        %v342 = vunpack.c.l.b16 %v272
        %v343 = vunpack.c.h.b16 %v272
        %v344 = vunpack.c.l.b16 %v273
        %v345 = vunpack.c.h.b16 %v273
        %v346 = vunpack.c.l.b16 %v274
        %v347 = vunpack.c.h.b16 %v274
        %v348 = vunpack.c.l.b16 %v275
        %v349 = vunpack.c.h.b16 %v275
        %v350 = vunpack.c.l.b16 %v276
        %v351 = vunpack.c.h.b16 %v276
        %v352 = vunpack.c.l.b16 %v277
        %v353 = vunpack.c.h.b16 %v277
        %v354 = vunpack.c.l.b16 %v278
        %v355 = vunpack.c.h.b16 %v278
        %v356 = vunpack.c.l.b16 %v279
        %v357 = vunpack.c.h.b16 %v279
        %v358 = vunpack.c.l.b16 %v280
        %v359 = vunpack.c.h.b16 %v280
        %v360 = vunpack.c.l.b16 %v281
        %v361 = vunpack.c.h.b16 %v281
        %v362 = vunpack.c.l.b16 %v282
        %v363 = vunpack.c.h.b16 %v282
        %v364 = vunpack.c.l.b16 %v283
        %v365 = vunpack.c.h.b16 %v283
        %v366 = vunpack.c.l.b16 %v284
        %v367 = vunpack.c.h.b16 %v284
        %v368 = vunpack.c.l.b16 %v285
        %v369 = vunpack.c.h.b16 %v285
        %v370 = vunpack.c.l.b16 %v286
        %v371 = vunpack.c.h.b16 %v286
        %v372 = vunpack.c.l.b16 %v287
        %v373 = vunpack.c.h.b16 %v287
        %v374 = vpack.c.b16 %v344, %v342
        %v375 = vpack.c.b16 %v345, %v343
        %v376 = vpack.c.b16 %v348, %v346
        %v377 = vpack.c.b16 %v349, %v347
        %v378 = vpack.c.b16 %v352, %v350
        %v379 = vpack.c.b16 %v353, %v351
        %v380 = vpack.c.b16 %v356, %v354
        %v381 = vpack.c.b16 %v357, %v355
        %v382 = vpack.c.b16 %v360, %v358
        %v383 = vpack.c.b16 %v361, %v359
        %v384 = vpack.c.b16 %v364, %v362
        %v385 = vpack.c.b16 %v365, %v363
        %v386 = vpack.c.b16 %v368, %v366
        %v387 = vpack.c.b16 %v369, %v367
        %v388 = vpack.c.b16 %v372, %v370
        %v389 = vpack.c.b16 %v373, %v371
        %v438 = vunpack.c.l.b16 %v288
        %v439 = vunpack.c.h.b16 %v288
        %v440 = vunpack.c.l.b16 %v289
        %v441 = vunpack.c.h.b16 %v289
        %v442 = vunpack.c.l.b16 %v290
        %v443 = vunpack.c.h.b16 %v290
        %v444 = vunpack.c.l.b16 %v291
        %v445 = vunpack.c.h.b16 %v291
        %v446 = vunpack.c.l.b16 %v292
        %v447 = vunpack.c.h.b16 %v292
        %v448 = vunpack.c.l.b16 %v293
        %v449 = vunpack.c.h.b16 %v293
        %v450 = vunpack.c.l.b16 %v294
        %v451 = vunpack.c.h.b16 %v294
        %v452 = vunpack.c.l.b16 %v295
        %v453 = vunpack.c.h.b16 %v295
        %v454 = vunpack.c.l.b16 %v296
        %v455 = vunpack.c.h.b16 %v296
        %v456 = vunpack.c.l.b16 %v297
        %v457 = vunpack.c.h.b16 %v297
        %v458 = vunpack.c.l.b16 %v298
        %v459 = vunpack.c.h.b16 %v298
        %v460 = vunpack.c.l.b16 %v299
        %v461 = vunpack.c.h.b16 %v299
        %v462 = vunpack.c.l.b16 %v300
        %v463 = vunpack.c.h.b16 %v300
        %v464 = vunpack.c.l.b16 %v301
        %v465 = vunpack.c.h.b16 %v301
        %v466 = vunpack.c.l.b16 %v302
        %v467 = vunpack.c.h.b16 %v302
        %v468 = vunpack.c.l.b16 %v303
        %v469 = vunpack.c.h.b16 %v303
        %v470 = vunpack.c.l.b16 %v304
        %v471 = vunpack.c.h.b16 %v304
        %v472 = vunpack.c.l.b16 %v305
        %v473 = vunpack.c.h.b16 %v305
        %v474 = vunpack.c.l.b16 %v306
        %v475 = vunpack.c.h.b16 %v306
        %v476 = vunpack.c.l.b16 %v307
        %v477 = vunpack.c.h.b16 %v307
        %v478 = vunpack.c.l.b16 %v308
        %v479 = vunpack.c.h.b16 %v308
        %v480 = vunpack.c.l.b16 %v309
        %v481 = vunpack.c.h.b16 %v309
        %v482 = vunpack.c.l.b16 %v310
        %v483 = vunpack.c.h.b16 %v310
        %v484 = vunpack.c.l.b16 %v311
        %v485 = vunpack.c.h.b16 %v311
        %v486 = vunpack.c.l.b16 %v312
        %v487 = vunpack.c.h.b16 %v312
        %v488 = vunpack.c.l.b16 %v313
        %v489 = vunpack.c.h.b16 %v313
        %v490 = vunpack.c.l.b16 %v314
        %v491 = vunpack.c.h.b16 %v314
        %v492 = vunpack.c.l.b16 %v315
        %v493 = vunpack.c.h.b16 %v315
        %v494 = vunpack.c.l.b16 %v316
        %v495 = vunpack.c.h.b16 %v316
        %v496 = vunpack.c.l.b16 %v317
        %v497 = vunpack.c.h.b16 %v317
        %v498 = vunpack.c.l.b16 %v318
        %v499 = vunpack.c.h.b16 %v318
        %v500 = vunpack.c.l.b16 %v319
        %v501 = vunpack.c.h.b16 %v319
        %v502 = vpack.c.b16 %v440, %v438
        %v503 = vpack.c.b16 %v441, %v439
        %v504 = vpack.c.b16 %v444, %v442
        %v505 = vpack.c.b16 %v445, %v443
        %v506 = vpack.c.b16 %v448, %v446
        %v507 = vpack.c.b16 %v449, %v447
        %v508 = vpack.c.b16 %v452, %v450
        %v509 = vpack.c.b16 %v453, %v451
        %v510 = vpack.c.b16 %v456, %v454
        %v511 = vpack.c.b16 %v457, %v455
        %v512 = vpack.c.b16 %v460, %v458
        %v513 = vpack.c.b16 %v461, %v459
        %v514 = vpack.c.b16 %v464, %v462
        %v515 = vpack.c.b16 %v465, %v463
        %v516 = vpack.c.b16 %v468, %v466
        %v517 = vpack.c.b16 %v469, %v467
        %v518 = vpack.c.b16 %v472, %v470
        %v519 = vpack.c.b16 %v473, %v471
        %v520 = vpack.c.b16 %v476, %v474
        %v521 = vpack.c.b16 %v477, %v475
        %v522 = vpack.c.b16 %v480, %v478
        %v523 = vpack.c.b16 %v481, %v479
        %v524 = vpack.c.b16 %v484, %v482
        %v525 = vpack.c.b16 %v485, %v483
        %v526 = vpack.c.b16 %v488, %v486
        %v527 = vpack.c.b16 %v489, %v487
        %v528 = vpack.c.b16 %v492, %v490
        %v529 = vpack.c.b16 %v493, %v491
        %v530 = vpack.c.b16 %v496, %v494
        %v531 = vpack.c.b16 %v497, %v495
        %v532 = vpack.c.b16 %v500, %v498
        %v533 = vpack.c.b16 %v501, %v499
        %566 = vmatpush.bf16.msra.mxu0 %v516
        %567 = vmatpush.bf16.msra.mxu0 %v514
        %568 = vmatpush.bf16.msra.mxu0 %v512
        %569 = vmatpush.bf16.msra.mxu0 %v510
        %570 = vmatpush.bf16.msra.mxu0 %v508
        %571 = vmatpush.bf16.msra.mxu0 %v506
        %572 = vmatpush.bf16.msra.mxu0 %v504
        %573 = vmatpush.bf16.msra.mxu0 %v502
        %574 = vmatmul.bf16.gmra.mxu0 %v374
        %v575 = vpop.f32.mrf.mxu0
        %v576 = vadd.f32 %v322, %v575
        %v577 = vpop.f32.mrf.mxu0
        %v578 = vadd.f32 %v322, %v577
        %579 = vmatmul.bf16.gmra.mxu0 %v376
        %v580 = vpop.f32.mrf.mxu0
        %v581 = vadd.f32 %v322, %v580
        %v582 = vpop.f32.mrf.mxu0
        %v583 = vadd.f32 %v322, %v582
        %584 = vmatmul.bf16.gmra.mxu0 %v378
        %v585 = vpop.f32.mrf.mxu0
        %v586 = vadd.f32 %v322, %v585
        %v587 = vpop.f32.mrf.mxu0
        %v588 = vadd.f32 %v322, %v587
        %589 = vmatmul.bf16.gmra.mxu0 %v380
        %v590 = vpop.f32.mrf.mxu0
        %v591 = vadd.f32 %v322, %v590
        %v592 = vpop.f32.mrf.mxu0
        %v593 = vadd.f32 %v322, %v592
        %594 = vmatmul.bf16.gmra.mxu0 %v382
        %v595 = vpop.f32.mrf.mxu0
        %v596 = vadd.f32 %v322, %v595
        %v597 = vpop.f32.mrf.mxu0
        %v598 = vadd.f32 %v322, %v597
        %599 = vmatmul.bf16.gmra.mxu0 %v384
        %v600 = vpop.f32.mrf.mxu0
        %v601 = vadd.f32 %v322, %v600
        %v602 = vpop.f32.mrf.mxu0
        %v603 = vadd.f32 %v322, %v602
        %604 = vmatmul.bf16.gmra.mxu0 %v386
        %v605 = vpop.f32.mrf.mxu0
        %v606 = vadd.f32 %v322, %v605
        %v607 = vpop.f32.mrf.mxu0
        %v608 = vadd.f32 %v322, %v607
        %609 = vmatmul.bf16.gmra.mxu0 %v388
        %v610 = vpop.f32.mrf.mxu0
        %v611 = vadd.f32 %v322, %v610
        %v612 = vpop.f32.mrf.mxu0
        %v613 = vadd.f32 %v322, %v612
        %614 = vdwg.mxu0
        %615 = vmatpush.bf16.msra.mxu0 %v532
        %616 = vmatpush.bf16.msra.mxu0 %v530
        %617 = vmatpush.bf16.msra.mxu0 %v528
        %618 = vmatpush.bf16.msra.mxu0 %v526
        %619 = vmatpush.bf16.msra.mxu0 %v524
        %620 = vmatpush.bf16.msra.mxu0 %v522
        %621 = vmatpush.bf16.msra.mxu0 %v520
        %622 = vmatpush.bf16.msra.mxu0 %v518
        %623 = vmatmul.bf16.gmra.mxu0 %v375
        %v624 = vpop.f32.mrf.mxu0
        %v625 = vadd.f32 %v576, %v624
        %v626 = vpop.f32.mrf.mxu0
        %v627 = vadd.f32 %v578, %v626
        %628 = vmatmul.bf16.gmra.mxu0 %v377
        %v629 = vpop.f32.mrf.mxu0
        %v630 = vadd.f32 %v581, %v629
        %v631 = vpop.f32.mrf.mxu0
        %v632 = vadd.f32 %v583, %v631
        %633 = vmatmul.bf16.gmra.mxu0 %v379
        %v634 = vpop.f32.mrf.mxu0
        %v635 = vadd.f32 %v586, %v634
        %v636 = vpop.f32.mrf.mxu0
        %v637 = vadd.f32 %v588, %v636
        %638 = vmatmul.bf16.gmra.mxu0 %v381
        %v639 = vpop.f32.mrf.mxu0
        %v640 = vadd.f32 %v591, %v639
        %v641 = vpop.f32.mrf.mxu0
        %v642 = vadd.f32 %v593, %v641
        %643 = vmatmul.bf16.gmra.mxu0 %v383
        %v644 = vpop.f32.mrf.mxu0
        %v645 = vadd.f32 %v596, %v644
        %v646 = vpop.f32.mrf.mxu0
        %v647 = vadd.f32 %v598, %v646
        %648 = vmatmul.bf16.gmra.mxu0 %v385
        %v649 = vpop.f32.mrf.mxu0
        %v650 = vadd.f32 %v601, %v649
        %v651 = vpop.f32.mrf.mxu0
        %v652 = vadd.f32 %v603, %v651
        %653 = vmatmul.bf16.gmra.mxu0 %v387
        %v654 = vpop.f32.mrf.mxu0
        %v655 = vadd.f32 %v606, %v654
        %v656 = vpop.f32.mrf.mxu0
        %v657 = vadd.f32 %v608, %v656
        %658 = vmatmul.bf16.gmra.mxu0 %v389
        %v659 = vpop.f32.mrf.mxu0
        %v660 = vadd.f32 %v611, %v659
        %v661 = vpop.f32.mrf.mxu0
        %v662 = vadd.f32 %v613, %v661
        %663 = vdwg.mxu0
        %664 = vmatpush.bf16.msra.mxu0 %v517
        %665 = vmatpush.bf16.msra.mxu0 %v515
        %666 = vmatpush.bf16.msra.mxu0 %v513
        %667 = vmatpush.bf16.msra.mxu0 %v511
        %668 = vmatpush.bf16.msra.mxu0 %v509
        %669 = vmatpush.bf16.msra.mxu0 %v507
        %670 = vmatpush.bf16.msra.mxu0 %v505
        %671 = vmatpush.bf16.msra.mxu0 %v503
        %672 = vmatmul.bf16.gmra.mxu0 %v374
        %v673 = vpop.f32.mrf.mxu0
        %v674 = vadd.f32 %v323, %v673
        %v675 = vpop.f32.mrf.mxu0
        %v676 = vadd.f32 %v323, %v675
        %677 = vmatmul.bf16.gmra.mxu0 %v376
        %v678 = vpop.f32.mrf.mxu0
        %v679 = vadd.f32 %v323, %v678
        %v680 = vpop.f32.mrf.mxu0
        %v681 = vadd.f32 %v323, %v680
        %682 = vmatmul.bf16.gmra.mxu0 %v378
        %v683 = vpop.f32.mrf.mxu0
        %v684 = vadd.f32 %v323, %v683
        %v685 = vpop.f32.mrf.mxu0
        %v686 = vadd.f32 %v323, %v685
        %687 = vmatmul.bf16.gmra.mxu0 %v380
        %v688 = vpop.f32.mrf.mxu0
        %v689 = vadd.f32 %v323, %v688
        %v690 = vpop.f32.mrf.mxu0
        %v691 = vadd.f32 %v323, %v690
        %692 = vmatmul.bf16.gmra.mxu0 %v382
        %v693 = vpop.f32.mrf.mxu0
        %v694 = vadd.f32 %v323, %v693
        %v695 = vpop.f32.mrf.mxu0
        %v696 = vadd.f32 %v323, %v695
        %697 = vmatmul.bf16.gmra.mxu0 %v384
        %v698 = vpop.f32.mrf.mxu0
        %v699 = vadd.f32 %v323, %v698
        %v700 = vpop.f32.mrf.mxu0
        %v701 = vadd.f32 %v323, %v700
        %702 = vmatmul.bf16.gmra.mxu0 %v386
        %v703 = vpop.f32.mrf.mxu0
        %v704 = vadd.f32 %v323, %v703
        %v705 = vpop.f32.mrf.mxu0
        %v706 = vadd.f32 %v323, %v705
        %707 = vmatmul.bf16.gmra.mxu0 %v388
        %v708 = vpop.f32.mrf.mxu0
        %v709 = vadd.f32 %v323, %v708
        %v710 = vpop.f32.mrf.mxu0
        %v711 = vadd.f32 %v323, %v710
        %712 = vdwg.mxu0
        %713 = vmatpush.bf16.msra.mxu0 %v533
        %714 = vmatpush.bf16.msra.mxu0 %v531
        %715 = vmatpush.bf16.msra.mxu0 %v529
        %716 = vmatpush.bf16.msra.mxu0 %v527
        %717 = vmatpush.bf16.msra.mxu0 %v525
        %718 = vmatpush.bf16.msra.mxu0 %v523
        %719 = vmatpush.bf16.msra.mxu0 %v521
        %720 = vmatpush.bf16.msra.mxu0 %v519
        %721 = vmatmul.bf16.gmra.mxu0 %v375
        %v722 = vpop.f32.mrf.mxu0
        %v723 = vadd.f32 %v674, %v722
        %v724 = vpop.f32.mrf.mxu0
        %v725 = vadd.f32 %v676, %v724
        %726 = vmatmul.bf16.gmra.mxu0 %v377
        %v727 = vpop.f32.mrf.mxu0
        %v728 = vadd.f32 %v679, %v727
        %v729 = vpop.f32.mrf.mxu0
        %v730 = vadd.f32 %v681, %v729
        %731 = vmatmul.bf16.gmra.mxu0 %v379
        %v732 = vpop.f32.mrf.mxu0
        %v733 = vadd.f32 %v684, %v732
        %v734 = vpop.f32.mrf.mxu0
        %v735 = vadd.f32 %v686, %v734
        %736 = vmatmul.bf16.gmra.mxu0 %v381
        %v737 = vpop.f32.mrf.mxu0
        %v738 = vadd.f32 %v689, %v737
        %v739 = vpop.f32.mrf.mxu0
        %v740 = vadd.f32 %v691, %v739
        %741 = vmatmul.bf16.gmra.mxu0 %v383
        %v742 = vpop.f32.mrf.mxu0
        %v743 = vadd.f32 %v694, %v742
        %v744 = vpop.f32.mrf.mxu0
        %v745 = vadd.f32 %v696, %v744
        %746 = vmatmul.bf16.gmra.mxu0 %v385
        %v747 = vpop.f32.mrf.mxu0
        %v748 = vadd.f32 %v699, %v747
        %v749 = vpop.f32.mrf.mxu0
        %v750 = vadd.f32 %v701, %v749
        %751 = vmatmul.bf16.gmra.mxu0 %v387
        %v752 = vpop.f32.mrf.mxu0
        %v753 = vadd.f32 %v704, %v752
        %v754 = vpop.f32.mrf.mxu0
        %v755 = vadd.f32 %v706, %v754
        %756 = vmatmul.bf16.gmra.mxu0 %v389
        %v757 = vpop.f32.mrf.mxu0
        %v758 = vadd.f32 %v709, %v757
        %v759 = vpop.f32.mrf.mxu0
        %v760 = vadd.f32 %v711, %v759
        %761 = vdwg.mxu0
        %v762 = vmul.f32 %v625, 0.5
        %v763 = vmul.f32 %v723, 0.5
        %v764 = vmul.f32 %v627, 0.5
        %v765 = vmul.f32 %v725, 0.5
        %v766 = vmul.f32 %v630, 0.5
        %v767 = vmul.f32 %v728, 0.5
        %v768 = vmul.f32 %v632, 0.5
        %v769 = vmul.f32 %v730, 0.5
        %v770 = vmul.f32 %v635, 0.5
        %v771 = vmul.f32 %v733, 0.5
        %v772 = vmul.f32 %v637, 0.5
        %v773 = vmul.f32 %v735, 0.5
        %v774 = vmul.f32 %v640, 0.5
        %v775 = vmul.f32 %v738, 0.5
        %v776 = vmul.f32 %v642, 0.5
        %v777 = vmul.f32 %v740, 0.5
        %v778 = vmul.f32 %v645, 0.5
        %v779 = vmul.f32 %v743, 0.5
        %v780 = vmul.f32 %v647, 0.5
        %v781 = vmul.f32 %v745, 0.5
        %v782 = vmul.f32 %v650, 0.5
        %v783 = vmul.f32 %v748, 0.5
        %v784 = vmul.f32 %v652, 0.5
        %v785 = vmul.f32 %v750, 0.5
        %v786 = vmul.f32 %v655, 0.5
        %v787 = vmul.f32 %v753, 0.5
        %v788 = vmul.f32 %v657, 0.5
        %v789 = vmul.f32 %v755, 0.5
        %v790 = vmul.f32 %v660, 0.5
        %v791 = vmul.f32 %v758, 0.5
        %v792 = vmul.f32 %v662, 0.5
        %v793 = vmul.f32 %v760, 0.5
        %v794 = vmul.f32 %v625, 0.70710677
        %v795 = vmul.f32 %v723, 0.70710677
        %v796 = vmul.f32 %v627, 0.70710677
        %v797 = vmul.f32 %v725, 0.70710677
        %v798 = vmul.f32 %v630, 0.70710677
        %v799 = vmul.f32 %v728, 0.70710677
        %v800 = vmul.f32 %v632, 0.70710677
        %v801 = vmul.f32 %v730, 0.70710677
        %v802 = vmul.f32 %v635, 0.70710677
        %v803 = vmul.f32 %v733, 0.70710677
        %v804 = vmul.f32 %v637, 0.70710677
        %v805 = vmul.f32 %v735, 0.70710677
        %v806 = vmul.f32 %v640, 0.70710677
        %v807 = vmul.f32 %v738, 0.70710677
        %v808 = vmul.f32 %v642, 0.70710677
        %v809 = vmul.f32 %v740, 0.70710677
        %v810 = vmul.f32 %v645, 0.70710677
        %v811 = vmul.f32 %v743, 0.70710677
        %v812 = vmul.f32 %v647, 0.70710677
        %v813 = vmul.f32 %v745, 0.70710677
        %v814 = vmul.f32 %v650, 0.70710677
        %v815 = vmul.f32 %v748, 0.70710677
        %v816 = vmul.f32 %v652, 0.70710677
        %v817 = vmul.f32 %v750, 0.70710677
        %v818 = vmul.f32 %v655, 0.70710677
        %v819 = vmul.f32 %v753, 0.70710677
        %v820 = vmul.f32 %v657, 0.70710677
        %v821 = vmul.f32 %v755, 0.70710677
        %v822 = vmul.f32 %v660, 0.70710677
        %v823 = vmul.f32 %v758, 0.70710677
        %v824 = vmul.f32 %v662, 0.70710677
        %v825 = vmul.f32 %v760, 0.70710677
        %v826 = vmul.f32 %v794, %v794
        %v827 = vmin.f32 16.0, %v826
        %v828 = vmul.f32 %v827, 2.1237322e-06
        %v829 = vadd.f32 %v828, 0.00028619796
        %v830 = vmul.f32 %v827, %v829
        %v831 = vadd.f32 %v830, 0.0036580483
        %v832 = vmul.f32 %v827, %v831
        %v833 = vadd.f32 %v832, 0.05243302
        %v834 = vmul.f32 %v827, %v833
        %v835 = vadd.f32 %v834, 0.18741608
        %v836 = vmul.f32 %v827, %v835
        %v837 = vadd.f32 %v836, 1.1283791
        %v838 = vmul.f32 %v794, %v837
        %v839 = vmul.f32 %v827, 3.8918573e-05
        %v840 = vadd.f32 %v839, 0.001143296
        %v841 = vmul.f32 %v827, %v840
        %v842 = vadd.f32 %v841, 0.014752088
        %v843 = vmul.f32 %v827, %v842
        %v844 = vadd.f32 %v843, 0.112945676
        %v845 = vmul.f32 %v827, %v844
        %v846 = vadd.f32 %v845, 0.4994258
        %v847 = vmul.f32 %v827, %v846
        %v848 = vadd.f32 %v847, 1.0
        %v849 = vrcp.pop %v848
        %v850 = vmul.f32 %v848, %v849
        %v851 = vsub.f32 1.0, %v850
        %v852 = vmul.f32 %v849, %v851
        %v853 = vadd.f32 %v849, %v852
        %vm854 = vweird.f32 %v848
        %vm855 = vweird.f32 %v849
        %vm856 = vmor %vm854, %vm855
        %v857 = vsel %vm856, %v849, %v853
        %v858 = vand.u32 2147483647, %v848
        %vm859 = vcmp.eq.f32.partialorder %v858, 8.507059e+37
        %v860 = vand.u32 %v848, 2147483648
        %v861 = vor.u32 1.1754944e-38, %v860
        %v862 = vsel %vm859, %v861, %v857
        %v863 = vmul.f32 %v838, %v862
        %v864 = vmin.f32 %v863, 1.0
        %v865 = vmax.f32 %v864, -1.0
        %v866 = vmul.f32 %v795, %v795
        %v867 = vmin.f32 16.0, %v866
        %v868 = vmul.f32 %v867, 2.1237322e-06
        %v869 = vadd.f32 %v868, 0.00028619796
        %v870 = vmul.f32 %v867, %v869
        %v871 = vadd.f32 %v870, 0.0036580483
        %v872 = vmul.f32 %v867, %v871
        %v873 = vadd.f32 %v872, 0.05243302
        %v874 = vmul.f32 %v867, %v873
        %v875 = vadd.f32 %v874, 0.18741608
        %v876 = vmul.f32 %v867, %v875
        %v877 = vadd.f32 %v876, 1.1283791
        %v878 = vmul.f32 %v795, %v877
        %v879 = vmul.f32 %v867, 3.8918573e-05
        %v880 = vadd.f32 %v879, 0.001143296
        %v881 = vmul.f32 %v867, %v880
        %v882 = vadd.f32 %v881, 0.014752088
        %v883 = vmul.f32 %v867, %v882
        %v884 = vadd.f32 %v883, 0.112945676
        %v885 = vmul.f32 %v867, %v884
        %v886 = vadd.f32 %v885, 0.4994258
        %v887 = vmul.f32 %v867, %v886
        %v888 = vadd.f32 %v887, 1.0
        %v889 = vrcp.pop %v888
        %v890 = vmul.f32 %v888, %v889
        %v891 = vsub.f32 1.0, %v890
        %v892 = vmul.f32 %v889, %v891
        %v893 = vadd.f32 %v889, %v892
        %vm894 = vweird.f32 %v888
        %vm895 = vweird.f32 %v889
        %vm896 = vmor %vm894, %vm895
        %v897 = vsel %vm896, %v889, %v893
        %v898 = vand.u32 2147483647, %v888
        %vm899 = vcmp.eq.f32.partialorder %v898, 8.507059e+37
        %v900 = vand.u32 %v888, 2147483648
        %v901 = vor.u32 1.1754944e-38, %v900
        %v902 = vsel %vm899, %v901, %v897
        %v903 = vmul.f32 %v878, %v902
        %v904 = vmin.f32 %v903, 1.0
        %v905 = vmax.f32 %v904, -1.0
        %v906 = vmul.f32 %v796, %v796
        %v907 = vmin.f32 16.0, %v906
        %v908 = vmul.f32 %v907, 2.1237322e-06
        %v909 = vadd.f32 %v908, 0.00028619796
        %v910 = vmul.f32 %v907, %v909
        %v911 = vadd.f32 %v910, 0.0036580483
        %v912 = vmul.f32 %v907, %v911
        %v913 = vadd.f32 %v912, 0.05243302
        %v914 = vmul.f32 %v907, %v913
        %v915 = vadd.f32 %v914, 0.18741608
        %v916 = vmul.f32 %v907, %v915
        %v917 = vadd.f32 %v916, 1.1283791
        %v918 = vmul.f32 %v796, %v917
        %v919 = vmul.f32 %v907, 3.8918573e-05
        %v920 = vadd.f32 %v919, 0.001143296
        %v921 = vmul.f32 %v907, %v920
        %v922 = vadd.f32 %v921, 0.014752088
        %v923 = vmul.f32 %v907, %v922
        %v924 = vadd.f32 %v923, 0.112945676
        %v925 = vmul.f32 %v907, %v924
        %v926 = vadd.f32 %v925, 0.4994258
        %v927 = vmul.f32 %v907, %v926
        %v928 = vadd.f32 %v927, 1.0
        %v929 = vrcp.pop %v928
        %v930 = vmul.f32 %v928, %v929
        %v931 = vsub.f32 1.0, %v930
        %v932 = vmul.f32 %v929, %v931
        %v933 = vadd.f32 %v929, %v932
        %vm934 = vweird.f32 %v928
        %vm935 = vweird.f32 %v929
        %vm936 = vmor %vm934, %vm935
        %v937 = vsel %vm936, %v929, %v933
        %v938 = vand.u32 2147483647, %v928
        %vm939 = vcmp.eq.f32.partialorder %v938, 8.507059e+37
        %v940 = vand.u32 %v928, 2147483648
        %v941 = vor.u32 1.1754944e-38, %v940
        %v942 = vsel %vm939, %v941, %v937
        %v943 = vmul.f32 %v918, %v942
        %v944 = vmin.f32 %v943, 1.0
        %v945 = vmax.f32 %v944, -1.0
        %v946 = vmul.f32 %v797, %v797
        %v947 = vmin.f32 16.0, %v946
        %v948 = vmul.f32 %v947, 2.1237322e-06
        %v949 = vadd.f32 %v948, 0.00028619796
        %v950 = vmul.f32 %v947, %v949
        %v951 = vadd.f32 %v950, 0.0036580483
        %v952 = vmul.f32 %v947, %v951
        %v953 = vadd.f32 %v952, 0.05243302
        %v954 = vmul.f32 %v947, %v953
        %v955 = vadd.f32 %v954, 0.18741608
        %v956 = vmul.f32 %v947, %v955
        %v957 = vadd.f32 %v956, 1.1283791
        %v958 = vmul.f32 %v797, %v957
        %v959 = vmul.f32 %v947, 3.8918573e-05
        %v960 = vadd.f32 %v959, 0.001143296
        %v961 = vmul.f32 %v947, %v960
        %v962 = vadd.f32 %v961, 0.014752088
        %v963 = vmul.f32 %v947, %v962
        %v964 = vadd.f32 %v963, 0.112945676
        %v965 = vmul.f32 %v947, %v964
        %v966 = vadd.f32 %v965, 0.4994258
        %v967 = vmul.f32 %v947, %v966
        %v968 = vadd.f32 %v967, 1.0
        %v969 = vrcp.pop %v968
        %v970 = vmul.f32 %v968, %v969
        %v971 = vsub.f32 1.0, %v970
        %v972 = vmul.f32 %v969, %v971
        %v973 = vadd.f32 %v969, %v972
        %vm974 = vweird.f32 %v968
        %vm975 = vweird.f32 %v969
        %vm976 = vmor %vm974, %vm975
        %v977 = vsel %vm976, %v969, %v973
        %v978 = vand.u32 2147483647, %v968
        %vm979 = vcmp.eq.f32.partialorder %v978, 8.507059e+37
        %v980 = vand.u32 %v968, 2147483648
        %v981 = vor.u32 1.1754944e-38, %v980
        %v982 = vsel %vm979, %v981, %v977
        %v983 = vmul.f32 %v958, %v982
        %v984 = vmin.f32 %v983, 1.0
        %v985 = vmax.f32 %v984, -1.0
        %v986 = vmul.f32 %v798, %v798
        %v987 = vmin.f32 16.0, %v986
        %v988 = vmul.f32 %v987, 2.1237322e-06
        %v989 = vadd.f32 %v988, 0.00028619796
        %v990 = vmul.f32 %v987, %v989
        %v991 = vadd.f32 %v990, 0.0036580483
        %v992 = vmul.f32 %v987, %v991
        %v993 = vadd.f32 %v992, 0.05243302
        %v994 = vmul.f32 %v987, %v993
        %v995 = vadd.f32 %v994, 0.18741608
        %v996 = vmul.f32 %v987, %v995
        %v997 = vadd.f32 %v996, 1.1283791
        %v998 = vmul.f32 %v798, %v997
        %v999 = vmul.f32 %v987, 3.8918573e-05
        %v1000 = vadd.f32 %v999, 0.001143296
        %v1001 = vmul.f32 %v987, %v1000
        %v1002 = vadd.f32 %v1001, 0.014752088
        %v1003 = vmul.f32 %v987, %v1002
        %v1004 = vadd.f32 %v1003, 0.112945676
        %v1005 = vmul.f32 %v987, %v1004
        %v1006 = vadd.f32 %v1005, 0.4994258
        %v1007 = vmul.f32 %v987, %v1006
        %v1008 = vadd.f32 %v1007, 1.0
        %v1009 = vrcp.pop %v1008
        %v1010 = vmul.f32 %v1008, %v1009
        %v1011 = vsub.f32 1.0, %v1010
        %v1012 = vmul.f32 %v1009, %v1011
        %v1013 = vadd.f32 %v1009, %v1012
        %vm1014 = vweird.f32 %v1008
        %vm1015 = vweird.f32 %v1009
        %vm1016 = vmor %vm1014, %vm1015
        %v1017 = vsel %vm1016, %v1009, %v1013
        %v1018 = vand.u32 2147483647, %v1008
        %vm1019 = vcmp.eq.f32.partialorder %v1018, 8.507059e+37
        %v1020 = vand.u32 %v1008, 2147483648
        %v1021 = vor.u32 1.1754944e-38, %v1020
        %v1022 = vsel %vm1019, %v1021, %v1017
        %v1023 = vmul.f32 %v998, %v1022
        %v1024 = vmin.f32 %v1023, 1.0
        %v1025 = vmax.f32 %v1024, -1.0
        %v1026 = vmul.f32 %v799, %v799
        %v1027 = vmin.f32 16.0, %v1026
        %v1028 = vmul.f32 %v1027, 2.1237322e-06
        %v1029 = vadd.f32 %v1028, 0.00028619796
        %v1030 = vmul.f32 %v1027, %v1029
        %v1031 = vadd.f32 %v1030, 0.0036580483
        %v1032 = vmul.f32 %v1027, %v1031
        %v1033 = vadd.f32 %v1032, 0.05243302
        %v1034 = vmul.f32 %v1027, %v1033
        %v1035 = vadd.f32 %v1034, 0.18741608
        %v1036 = vmul.f32 %v1027, %v1035
        %v1037 = vadd.f32 %v1036, 1.1283791
        %v1038 = vmul.f32 %v799, %v1037
        %v1039 = vmul.f32 %v1027, 3.8918573e-05
        %v1040 = vadd.f32 %v1039, 0.001143296
        %v1041 = vmul.f32 %v1027, %v1040
        %v1042 = vadd.f32 %v1041, 0.014752088
        %v1043 = vmul.f32 %v1027, %v1042
        %v1044 = vadd.f32 %v1043, 0.112945676
        %v1045 = vmul.f32 %v1027, %v1044
        %v1046 = vadd.f32 %v1045, 0.4994258
        %v1047 = vmul.f32 %v1027, %v1046
        %v1048 = vadd.f32 %v1047, 1.0
        %v1049 = vrcp.pop %v1048
        %v1050 = vmul.f32 %v1048, %v1049
        %v1051 = vsub.f32 1.0, %v1050
        %v1052 = vmul.f32 %v1049, %v1051
        %v1053 = vadd.f32 %v1049, %v1052
        %vm1054 = vweird.f32 %v1048
        %vm1055 = vweird.f32 %v1049
        %vm1056 = vmor %vm1054, %vm1055
        %v1057 = vsel %vm1056, %v1049, %v1053
        %v1058 = vand.u32 2147483647, %v1048
        %vm1059 = vcmp.eq.f32.partialorder %v1058, 8.507059e+37
        %v1060 = vand.u32 %v1048, 2147483648
        %v1061 = vor.u32 1.1754944e-38, %v1060
        %v1062 = vsel %vm1059, %v1061, %v1057
        %v1063 = vmul.f32 %v1038, %v1062
        %v1064 = vmin.f32 %v1063, 1.0
        %v1065 = vmax.f32 %v1064, -1.0
        %v1066 = vmul.f32 %v800, %v800
        %v1067 = vmin.f32 16.0, %v1066
        %v1068 = vmul.f32 %v1067, 2.1237322e-06
        %v1069 = vadd.f32 %v1068, 0.00028619796
        %v1070 = vmul.f32 %v1067, %v1069
        %v1071 = vadd.f32 %v1070, 0.0036580483
        %v1072 = vmul.f32 %v1067, %v1071
        %v1073 = vadd.f32 %v1072, 0.05243302
        %v1074 = vmul.f32 %v1067, %v1073
        %v1075 = vadd.f32 %v1074, 0.18741608
        %v1076 = vmul.f32 %v1067, %v1075
        %v1077 = vadd.f32 %v1076, 1.1283791
        %v1078 = vmul.f32 %v800, %v1077
        %v1079 = vmul.f32 %v1067, 3.8918573e-05
        %v1080 = vadd.f32 %v1079, 0.001143296
        %v1081 = vmul.f32 %v1067, %v1080
        %v1082 = vadd.f32 %v1081, 0.014752088
        %v1083 = vmul.f32 %v1067, %v1082
        %v1084 = vadd.f32 %v1083, 0.112945676
        %v1085 = vmul.f32 %v1067, %v1084
        %v1086 = vadd.f32 %v1085, 0.4994258
        %v1087 = vmul.f32 %v1067, %v1086
        %v1088 = vadd.f32 %v1087, 1.0
        %v1089 = vrcp.pop %v1088
        %v1090 = vmul.f32 %v1088, %v1089
        %v1091 = vsub.f32 1.0, %v1090
        %v1092 = vmul.f32 %v1089, %v1091
        %v1093 = vadd.f32 %v1089, %v1092
        %vm1094 = vweird.f32 %v1088
        %vm1095 = vweird.f32 %v1089
        %vm1096 = vmor %vm1094, %vm1095
        %v1097 = vsel %vm1096, %v1089, %v1093
        %v1098 = vand.u32 2147483647, %v1088
        %vm1099 = vcmp.eq.f32.partialorder %v1098, 8.507059e+37
        %v1100 = vand.u32 %v1088, 2147483648
        %v1101 = vor.u32 1.1754944e-38, %v1100
        %v1102 = vsel %vm1099, %v1101, %v1097
        %v1103 = vmul.f32 %v1078, %v1102
        %v1104 = vmin.f32 %v1103, 1.0
        %v1105 = vmax.f32 %v1104, -1.0
        %v1106 = vmul.f32 %v801, %v801
        %v1107 = vmin.f32 16.0, %v1106
        %v1108 = vmul.f32 %v1107, 2.1237322e-06
        %v1109 = vadd.f32 %v1108, 0.00028619796
        %v1110 = vmul.f32 %v1107, %v1109
        %v1111 = vadd.f32 %v1110, 0.0036580483
        %v1112 = vmul.f32 %v1107, %v1111
        %v1113 = vadd.f32 %v1112, 0.05243302
        %v1114 = vmul.f32 %v1107, %v1113
        %v1115 = vadd.f32 %v1114, 0.18741608
        %v1116 = vmul.f32 %v1107, %v1115
        %v1117 = vadd.f32 %v1116, 1.1283791
        %v1118 = vmul.f32 %v801, %v1117
        %v1119 = vmul.f32 %v1107, 3.8918573e-05
        %v1120 = vadd.f32 %v1119, 0.001143296
        %v1121 = vmul.f32 %v1107, %v1120
        %v1122 = vadd.f32 %v1121, 0.014752088
        %v1123 = vmul.f32 %v1107, %v1122
        %v1124 = vadd.f32 %v1123, 0.112945676
        %v1125 = vmul.f32 %v1107, %v1124
        %v1126 = vadd.f32 %v1125, 0.4994258
        %v1127 = vmul.f32 %v1107, %v1126
        %v1128 = vadd.f32 %v1127, 1.0
        %v1129 = vrcp.pop %v1128
        %v1130 = vmul.f32 %v1128, %v1129
        %v1131 = vsub.f32 1.0, %v1130
        %v1132 = vmul.f32 %v1129, %v1131
        %v1133 = vadd.f32 %v1129, %v1132
        %vm1134 = vweird.f32 %v1128
        %vm1135 = vweird.f32 %v1129
        %vm1136 = vmor %vm1134, %vm1135
        %v1137 = vsel %vm1136, %v1129, %v1133
        %v1138 = vand.u32 2147483647, %v1128
        %vm1139 = vcmp.eq.f32.partialorder %v1138, 8.507059e+37
        %v1140 = vand.u32 %v1128, 2147483648
        %v1141 = vor.u32 1.1754944e-38, %v1140
        %v1142 = vsel %vm1139, %v1141, %v1137
        %v1143 = vmul.f32 %v1118, %v1142
        %v1144 = vmin.f32 %v1143, 1.0
        %v1145 = vmax.f32 %v1144, -1.0
        %v1146 = vmul.f32 %v802, %v802
        %v1147 = vmin.f32 16.0, %v1146
        %v1148 = vmul.f32 %v1147, 2.1237322e-06
        %v1149 = vadd.f32 %v1148, 0.00028619796
        %v1150 = vmul.f32 %v1147, %v1149
        %v1151 = vadd.f32 %v1150, 0.0036580483
        %v1152 = vmul.f32 %v1147, %v1151
        %v1153 = vadd.f32 %v1152, 0.05243302
        %v1154 = vmul.f32 %v1147, %v1153
        %v1155 = vadd.f32 %v1154, 0.18741608
        %v1156 = vmul.f32 %v1147, %v1155
        %v1157 = vadd.f32 %v1156, 1.1283791
        %v1158 = vmul.f32 %v802, %v1157
        %v1159 = vmul.f32 %v1147, 3.8918573e-05
        %v1160 = vadd.f32 %v1159, 0.001143296
        %v1161 = vmul.f32 %v1147, %v1160
        %v1162 = vadd.f32 %v1161, 0.014752088
        %v1163 = vmul.f32 %v1147, %v1162
        %v1164 = vadd.f32 %v1163, 0.112945676
        %v1165 = vmul.f32 %v1147, %v1164
        %v1166 = vadd.f32 %v1165, 0.4994258
        %v1167 = vmul.f32 %v1147, %v1166
        %v1168 = vadd.f32 %v1167, 1.0
        %v1169 = vrcp.pop %v1168
        %v1170 = vmul.f32 %v1168, %v1169
        %v1171 = vsub.f32 1.0, %v1170
        %v1172 = vmul.f32 %v1169, %v1171
        %v1173 = vadd.f32 %v1169, %v1172
        %vm1174 = vweird.f32 %v1168
        %vm1175 = vweird.f32 %v1169
        %vm1176 = vmor %vm1174, %vm1175
        %v1177 = vsel %vm1176, %v1169, %v1173
        %v1178 = vand.u32 2147483647, %v1168
        %vm1179 = vcmp.eq.f32.partialorder %v1178, 8.507059e+37
        %v1180 = vand.u32 %v1168, 2147483648
        %v1181 = vor.u32 1.1754944e-38, %v1180
        %v1182 = vsel %vm1179, %v1181, %v1177
        %v1183 = vmul.f32 %v1158, %v1182
        %v1184 = vmin.f32 %v1183, 1.0
        %v1185 = vmax.f32 %v1184, -1.0
        %v1186 = vmul.f32 %v803, %v803
        %v1187 = vmin.f32 16.0, %v1186
        %v1188 = vmul.f32 %v1187, 2.1237322e-06
        %v1189 = vadd.f32 %v1188, 0.00028619796
        %v1190 = vmul.f32 %v1187, %v1189
        %v1191 = vadd.f32 %v1190, 0.0036580483
        %v1192 = vmul.f32 %v1187, %v1191
        %v1193 = vadd.f32 %v1192, 0.05243302
        %v1194 = vmul.f32 %v1187, %v1193
        %v1195 = vadd.f32 %v1194, 0.18741608
        %v1196 = vmul.f32 %v1187, %v1195
        %v1197 = vadd.f32 %v1196, 1.1283791
        %v1198 = vmul.f32 %v803, %v1197
        %v1199 = vmul.f32 %v1187, 3.8918573e-05
        %v1200 = vadd.f32 %v1199, 0.001143296
        %v1201 = vmul.f32 %v1187, %v1200
        %v1202 = vadd.f32 %v1201, 0.014752088
        %v1203 = vmul.f32 %v1187, %v1202
        %v1204 = vadd.f32 %v1203, 0.112945676
        %v1205 = vmul.f32 %v1187, %v1204
        %v1206 = vadd.f32 %v1205, 0.4994258
        %v1207 = vmul.f32 %v1187, %v1206
        %v1208 = vadd.f32 %v1207, 1.0
        %v1209 = vrcp.pop %v1208
        %v1210 = vmul.f32 %v1208, %v1209
        %v1211 = vsub.f32 1.0, %v1210
        %v1212 = vmul.f32 %v1209, %v1211
        %v1213 = vadd.f32 %v1209, %v1212
        %vm1214 = vweird.f32 %v1208
        %vm1215 = vweird.f32 %v1209
        %vm1216 = vmor %vm1214, %vm1215
        %v1217 = vsel %vm1216, %v1209, %v1213
        %v1218 = vand.u32 2147483647, %v1208
        %vm1219 = vcmp.eq.f32.partialorder %v1218, 8.507059e+37
        %v1220 = vand.u32 %v1208, 2147483648
        %v1221 = vor.u32 1.1754944e-38, %v1220
        %v1222 = vsel %vm1219, %v1221, %v1217
        %v1223 = vmul.f32 %v1198, %v1222
        %v1224 = vmin.f32 %v1223, 1.0
        %v1225 = vmax.f32 %v1224, -1.0
        %v1226 = vmul.f32 %v804, %v804
        %v1227 = vmin.f32 16.0, %v1226
        %v1228 = vmul.f32 %v1227, 2.1237322e-06
        %v1229 = vadd.f32 %v1228, 0.00028619796
        %v1230 = vmul.f32 %v1227, %v1229
        %v1231 = vadd.f32 %v1230, 0.0036580483
        %v1232 = vmul.f32 %v1227, %v1231
        %v1233 = vadd.f32 %v1232, 0.05243302
        %v1234 = vmul.f32 %v1227, %v1233
        %v1235 = vadd.f32 %v1234, 0.18741608
        %v1236 = vmul.f32 %v1227, %v1235
        %v1237 = vadd.f32 %v1236, 1.1283791
        %v1238 = vmul.f32 %v804, %v1237
        %v1239 = vmul.f32 %v1227, 3.8918573e-05
        %v1240 = vadd.f32 %v1239, 0.001143296
        %v1241 = vmul.f32 %v1227, %v1240
        %v1242 = vadd.f32 %v1241, 0.014752088
        %v1243 = vmul.f32 %v1227, %v1242
        %v1244 = vadd.f32 %v1243, 0.112945676
        %v1245 = vmul.f32 %v1227, %v1244
        %v1246 = vadd.f32 %v1245, 0.4994258
        %v1247 = vmul.f32 %v1227, %v1246
        %v1248 = vadd.f32 %v1247, 1.0
        %v1249 = vrcp.pop %v1248
        %v1250 = vmul.f32 %v1248, %v1249
        %v1251 = vsub.f32 1.0, %v1250
        %v1252 = vmul.f32 %v1249, %v1251
        %v1253 = vadd.f32 %v1249, %v1252
        %vm1254 = vweird.f32 %v1248
        %vm1255 = vweird.f32 %v1249
        %vm1256 = vmor %vm1254, %vm1255
        %v1257 = vsel %vm1256, %v1249, %v1253
        %v1258 = vand.u32 2147483647, %v1248
        %vm1259 = vcmp.eq.f32.partialorder %v1258, 8.507059e+37
        %v1260 = vand.u32 %v1248, 2147483648
        %v1261 = vor.u32 1.1754944e-38, %v1260
        %v1262 = vsel %vm1259, %v1261, %v1257
        %v1263 = vmul.f32 %v1238, %v1262
        %v1264 = vmin.f32 %v1263, 1.0
        %v1265 = vmax.f32 %v1264, -1.0
        %v1266 = vmul.f32 %v805, %v805
        %v1267 = vmin.f32 16.0, %v1266
        %v1268 = vmul.f32 %v1267, 2.1237322e-06
        %v1269 = vadd.f32 %v1268, 0.00028619796
        %v1270 = vmul.f32 %v1267, %v1269
        %v1271 = vadd.f32 %v1270, 0.0036580483
        %v1272 = vmul.f32 %v1267, %v1271
        %v1273 = vadd.f32 %v1272, 0.05243302
        %v1274 = vmul.f32 %v1267, %v1273
        %v1275 = vadd.f32 %v1274, 0.18741608
        %v1276 = vmul.f32 %v1267, %v1275
        %v1277 = vadd.f32 %v1276, 1.1283791
        %v1278 = vmul.f32 %v805, %v1277
        %v1279 = vmul.f32 %v1267, 3.8918573e-05
        %v1280 = vadd.f32 %v1279, 0.001143296
        %v1281 = vmul.f32 %v1267, %v1280
        %v1282 = vadd.f32 %v1281, 0.014752088
        %v1283 = vmul.f32 %v1267, %v1282
        %v1284 = vadd.f32 %v1283, 0.112945676
        %v1285 = vmul.f32 %v1267, %v1284
        %v1286 = vadd.f32 %v1285, 0.4994258
        %v1287 = vmul.f32 %v1267, %v1286
        %v1288 = vadd.f32 %v1287, 1.0
        %v1289 = vrcp.pop %v1288
        %v1290 = vmul.f32 %v1288, %v1289
        %v1291 = vsub.f32 1.0, %v1290
        %v1292 = vmul.f32 %v1289, %v1291
        %v1293 = vadd.f32 %v1289, %v1292
        %vm1294 = vweird.f32 %v1288
        %vm1295 = vweird.f32 %v1289
        %vm1296 = vmor %vm1294, %vm1295
        %v1297 = vsel %vm1296, %v1289, %v1293
        %v1298 = vand.u32 2147483647, %v1288
        %vm1299 = vcmp.eq.f32.partialorder %v1298, 8.507059e+37
        %v1300 = vand.u32 %v1288, 2147483648
        %v1301 = vor.u32 1.1754944e-38, %v1300
        %v1302 = vsel %vm1299, %v1301, %v1297
        %v1303 = vmul.f32 %v1278, %v1302
        %v1304 = vmin.f32 %v1303, 1.0
        %v1305 = vmax.f32 %v1304, -1.0
        %v1306 = vmul.f32 %v806, %v806
        %v1307 = vmin.f32 16.0, %v1306
        %v1308 = vmul.f32 %v1307, 2.1237322e-06
        %v1309 = vadd.f32 %v1308, 0.00028619796
        %v1310 = vmul.f32 %v1307, %v1309
        %v1311 = vadd.f32 %v1310, 0.0036580483
        %v1312 = vmul.f32 %v1307, %v1311
        %v1313 = vadd.f32 %v1312, 0.05243302
        %v1314 = vmul.f32 %v1307, %v1313
        %v1315 = vadd.f32 %v1314, 0.18741608
        %v1316 = vmul.f32 %v1307, %v1315
        %v1317 = vadd.f32 %v1316, 1.1283791
        %v1318 = vmul.f32 %v806, %v1317
        %v1319 = vmul.f32 %v1307, 3.8918573e-05
        %v1320 = vadd.f32 %v1319, 0.001143296
        %v1321 = vmul.f32 %v1307, %v1320
        %v1322 = vadd.f32 %v1321, 0.014752088
        %v1323 = vmul.f32 %v1307, %v1322
        %v1324 = vadd.f32 %v1323, 0.112945676
        %v1325 = vmul.f32 %v1307, %v1324
        %v1326 = vadd.f32 %v1325, 0.4994258
        %v1327 = vmul.f32 %v1307, %v1326
        %v1328 = vadd.f32 %v1327, 1.0
        %v1329 = vrcp.pop %v1328
        %v1330 = vmul.f32 %v1328, %v1329
        %v1331 = vsub.f32 1.0, %v1330
        %v1332 = vmul.f32 %v1329, %v1331
        %v1333 = vadd.f32 %v1329, %v1332
        %vm1334 = vweird.f32 %v1328
        %vm1335 = vweird.f32 %v1329
        %vm1336 = vmor %vm1334, %vm1335
        %v1337 = vsel %vm1336, %v1329, %v1333
        %v1338 = vand.u32 2147483647, %v1328
        %vm1339 = vcmp.eq.f32.partialorder %v1338, 8.507059e+37
        %v1340 = vand.u32 %v1328, 2147483648
        %v1341 = vor.u32 1.1754944e-38, %v1340
        %v1342 = vsel %vm1339, %v1341, %v1337
        %v1343 = vmul.f32 %v1318, %v1342
        %v1344 = vmin.f32 %v1343, 1.0
        %v1345 = vmax.f32 %v1344, -1.0
        %v1346 = vmul.f32 %v807, %v807
        %v1347 = vmin.f32 16.0, %v1346
        %v1348 = vmul.f32 %v1347, 2.1237322e-06
        %v1349 = vadd.f32 %v1348, 0.00028619796
        %v1350 = vmul.f32 %v1347, %v1349
        %v1351 = vadd.f32 %v1350, 0.0036580483
        %v1352 = vmul.f32 %v1347, %v1351
        %v1353 = vadd.f32 %v1352, 0.05243302
        %v1354 = vmul.f32 %v1347, %v1353
        %v1355 = vadd.f32 %v1354, 0.18741608
        %v1356 = vmul.f32 %v1347, %v1355
        %v1357 = vadd.f32 %v1356, 1.1283791
        %v1358 = vmul.f32 %v807, %v1357
        %v1359 = vmul.f32 %v1347, 3.8918573e-05
        %v1360 = vadd.f32 %v1359, 0.001143296
        %v1361 = vmul.f32 %v1347, %v1360
        %v1362 = vadd.f32 %v1361, 0.014752088
        %v1363 = vmul.f32 %v1347, %v1362
        %v1364 = vadd.f32 %v1363, 0.112945676
        %v1365 = vmul.f32 %v1347, %v1364
        %v1366 = vadd.f32 %v1365, 0.4994258
        %v1367 = vmul.f32 %v1347, %v1366
        %v1368 = vadd.f32 %v1367, 1.0
        %v1369 = vrcp.pop %v1368
        %v1370 = vmul.f32 %v1368, %v1369
        %v1371 = vsub.f32 1.0, %v1370
        %v1372 = vmul.f32 %v1369, %v1371
        %v1373 = vadd.f32 %v1369, %v1372
        %vm1374 = vweird.f32 %v1368
        %vm1375 = vweird.f32 %v1369
        %vm1376 = vmor %vm1374, %vm1375
        %v1377 = vsel %vm1376, %v1369, %v1373
        %v1378 = vand.u32 2147483647, %v1368
        %vm1379 = vcmp.eq.f32.partialorder %v1378, 8.507059e+37
        %v1380 = vand.u32 %v1368, 2147483648
        %v1381 = vor.u32 1.1754944e-38, %v1380
        %v1382 = vsel %vm1379, %v1381, %v1377
        %v1383 = vmul.f32 %v1358, %v1382
        %v1384 = vmin.f32 %v1383, 1.0
        %v1385 = vmax.f32 %v1384, -1.0
        %v1386 = vmul.f32 %v808, %v808
        %v1387 = vmin.f32 16.0, %v1386
        %v1388 = vmul.f32 %v1387, 2.1237322e-06
        %v1389 = vadd.f32 %v1388, 0.00028619796
        %v1390 = vmul.f32 %v1387, %v1389
        %v1391 = vadd.f32 %v1390, 0.0036580483
        %v1392 = vmul.f32 %v1387, %v1391
        %v1393 = vadd.f32 %v1392, 0.05243302
        %v1394 = vmul.f32 %v1387, %v1393
        %v1395 = vadd.f32 %v1394, 0.18741608
        %v1396 = vmul.f32 %v1387, %v1395
        %v1397 = vadd.f32 %v1396, 1.1283791
        %v1398 = vmul.f32 %v808, %v1397
        %v1399 = vmul.f32 %v1387, 3.8918573e-05
        %v1400 = vadd.f32 %v1399, 0.001143296
        %v1401 = vmul.f32 %v1387, %v1400
        %v1402 = vadd.f32 %v1401, 0.014752088
        %v1403 = vmul.f32 %v1387, %v1402
        %v1404 = vadd.f32 %v1403, 0.112945676
        %v1405 = vmul.f32 %v1387, %v1404
        %v1406 = vadd.f32 %v1405, 0.4994258
        %v1407 = vmul.f32 %v1387, %v1406
        %v1408 = vadd.f32 %v1407, 1.0
        %v1409 = vrcp.pop %v1408
        %v1410 = vmul.f32 %v1408, %v1409
        %v1411 = vsub.f32 1.0, %v1410
        %v1412 = vmul.f32 %v1409, %v1411
        %v1413 = vadd.f32 %v1409, %v1412
        %vm1414 = vweird.f32 %v1408
        %vm1415 = vweird.f32 %v1409
        %vm1416 = vmor %vm1414, %vm1415
        %v1417 = vsel %vm1416, %v1409, %v1413
        %v1418 = vand.u32 2147483647, %v1408
        %vm1419 = vcmp.eq.f32.partialorder %v1418, 8.507059e+37
        %v1420 = vand.u32 %v1408, 2147483648
        %v1421 = vor.u32 1.1754944e-38, %v1420
        %v1422 = vsel %vm1419, %v1421, %v1417
        %v1423 = vmul.f32 %v1398, %v1422
        %v1424 = vmin.f32 %v1423, 1.0
        %v1425 = vmax.f32 %v1424, -1.0
        %v1426 = vmul.f32 %v809, %v809
        %v1427 = vmin.f32 16.0, %v1426
        %v1428 = vmul.f32 %v1427, 2.1237322e-06
        %v1429 = vadd.f32 %v1428, 0.00028619796
        %v1430 = vmul.f32 %v1427, %v1429
        %v1431 = vadd.f32 %v1430, 0.0036580483
        %v1432 = vmul.f32 %v1427, %v1431
        %v1433 = vadd.f32 %v1432, 0.05243302
        %v1434 = vmul.f32 %v1427, %v1433
        %v1435 = vadd.f32 %v1434, 0.18741608
        %v1436 = vmul.f32 %v1427, %v1435
        %v1437 = vadd.f32 %v1436, 1.1283791
        %v1438 = vmul.f32 %v809, %v1437
        %v1439 = vmul.f32 %v1427, 3.8918573e-05
        %v1440 = vadd.f32 %v1439, 0.001143296
        %v1441 = vmul.f32 %v1427, %v1440
        %v1442 = vadd.f32 %v1441, 0.014752088
        %v1443 = vmul.f32 %v1427, %v1442
        %v1444 = vadd.f32 %v1443, 0.112945676
        %v1445 = vmul.f32 %v1427, %v1444
        %v1446 = vadd.f32 %v1445, 0.4994258
        %v1447 = vmul.f32 %v1427, %v1446
        %v1448 = vadd.f32 %v1447, 1.0
        %v1449 = vrcp.pop %v1448
        %v1450 = vmul.f32 %v1448, %v1449
        %v1451 = vsub.f32 1.0, %v1450
        %v1452 = vmul.f32 %v1449, %v1451
        %v1453 = vadd.f32 %v1449, %v1452
        %vm1454 = vweird.f32 %v1448
        %vm1455 = vweird.f32 %v1449
        %vm1456 = vmor %vm1454, %vm1455
        %v1457 = vsel %vm1456, %v1449, %v1453
        %v1458 = vand.u32 2147483647, %v1448
        %vm1459 = vcmp.eq.f32.partialorder %v1458, 8.507059e+37
        %v1460 = vand.u32 %v1448, 2147483648
        %v1461 = vor.u32 1.1754944e-38, %v1460
        %v1462 = vsel %vm1459, %v1461, %v1457
        %v1463 = vmul.f32 %v1438, %v1462
        %v1464 = vmin.f32 %v1463, 1.0
        %v1465 = vmax.f32 %v1464, -1.0
        %v1466 = vmul.f32 %v810, %v810
        %v1467 = vmin.f32 16.0, %v1466
        %v1468 = vmul.f32 %v1467, 2.1237322e-06
        %v1469 = vadd.f32 %v1468, 0.00028619796
        %v1470 = vmul.f32 %v1467, %v1469
        %v1471 = vadd.f32 %v1470, 0.0036580483
        %v1472 = vmul.f32 %v1467, %v1471
        %v1473 = vadd.f32 %v1472, 0.05243302
        %v1474 = vmul.f32 %v1467, %v1473
        %v1475 = vadd.f32 %v1474, 0.18741608
        %v1476 = vmul.f32 %v1467, %v1475
        %v1477 = vadd.f32 %v1476, 1.1283791
        %v1478 = vmul.f32 %v810, %v1477
        %v1479 = vmul.f32 %v1467, 3.8918573e-05
        %v1480 = vadd.f32 %v1479, 0.001143296
        %v1481 = vmul.f32 %v1467, %v1480
        %v1482 = vadd.f32 %v1481, 0.014752088
        %v1483 = vmul.f32 %v1467, %v1482
        %v1484 = vadd.f32 %v1483, 0.112945676
        %v1485 = vmul.f32 %v1467, %v1484
        %v1486 = vadd.f32 %v1485, 0.4994258
        %v1487 = vmul.f32 %v1467, %v1486
        %v1488 = vadd.f32 %v1487, 1.0
        %v1489 = vrcp.pop %v1488
        %v1490 = vmul.f32 %v1488, %v1489
        %v1491 = vsub.f32 1.0, %v1490
        %v1492 = vmul.f32 %v1489, %v1491
        %v1493 = vadd.f32 %v1489, %v1492
        %vm1494 = vweird.f32 %v1488
        %vm1495 = vweird.f32 %v1489
        %vm1496 = vmor %vm1494, %vm1495
        %v1497 = vsel %vm1496, %v1489, %v1493
        %v1498 = vand.u32 2147483647, %v1488
        %vm1499 = vcmp.eq.f32.partialorder %v1498, 8.507059e+37
        %v1500 = vand.u32 %v1488, 2147483648
        %v1501 = vor.u32 1.1754944e-38, %v1500
        %v1502 = vsel %vm1499, %v1501, %v1497
        %v1503 = vmul.f32 %v1478, %v1502
        %v1504 = vmin.f32 %v1503, 1.0
        %v1505 = vmax.f32 %v1504, -1.0
        %v1506 = vmul.f32 %v811, %v811
        %v1507 = vmin.f32 16.0, %v1506
        %v1508 = vmul.f32 %v1507, 2.1237322e-06
        %v1509 = vadd.f32 %v1508, 0.00028619796
        %v1510 = vmul.f32 %v1507, %v1509
        %v1511 = vadd.f32 %v1510, 0.0036580483
        %v1512 = vmul.f32 %v1507, %v1511
        %v1513 = vadd.f32 %v1512, 0.05243302
        %v1514 = vmul.f32 %v1507, %v1513
        %v1515 = vadd.f32 %v1514, 0.18741608
        %v1516 = vmul.f32 %v1507, %v1515
        %v1517 = vadd.f32 %v1516, 1.1283791
        %v1518 = vmul.f32 %v811, %v1517
        %v1519 = vmul.f32 %v1507, 3.8918573e-05
        %v1520 = vadd.f32 %v1519, 0.001143296
        %v1521 = vmul.f32 %v1507, %v1520
        %v1522 = vadd.f32 %v1521, 0.014752088
        %v1523 = vmul.f32 %v1507, %v1522
        %v1524 = vadd.f32 %v1523, 0.112945676
        %v1525 = vmul.f32 %v1507, %v1524
        %v1526 = vadd.f32 %v1525, 0.4994258
        %v1527 = vmul.f32 %v1507, %v1526
        %v1528 = vadd.f32 %v1527, 1.0
        %v1529 = vrcp.pop %v1528
        %v1530 = vmul.f32 %v1528, %v1529
        %v1531 = vsub.f32 1.0, %v1530
        %v1532 = vmul.f32 %v1529, %v1531
        %v1533 = vadd.f32 %v1529, %v1532
        %vm1534 = vweird.f32 %v1528
        %vm1535 = vweird.f32 %v1529
        %vm1536 = vmor %vm1534, %vm1535
        %v1537 = vsel %vm1536, %v1529, %v1533
        %v1538 = vand.u32 2147483647, %v1528
        %vm1539 = vcmp.eq.f32.partialorder %v1538, 8.507059e+37
        %v1540 = vand.u32 %v1528, 2147483648
        %v1541 = vor.u32 1.1754944e-38, %v1540
        %v1542 = vsel %vm1539, %v1541, %v1537
        %v1543 = vmul.f32 %v1518, %v1542
        %v1544 = vmin.f32 %v1543, 1.0
        %v1545 = vmax.f32 %v1544, -1.0
        %v1546 = vmul.f32 %v812, %v812
        %v1547 = vmin.f32 16.0, %v1546
        %v1548 = vmul.f32 %v1547, 2.1237322e-06
        %v1549 = vadd.f32 %v1548, 0.00028619796
        %v1550 = vmul.f32 %v1547, %v1549
        %v1551 = vadd.f32 %v1550, 0.0036580483
        %v1552 = vmul.f32 %v1547, %v1551
        %v1553 = vadd.f32 %v1552, 0.05243302
        %v1554 = vmul.f32 %v1547, %v1553
        %v1555 = vadd.f32 %v1554, 0.18741608
        %v1556 = vmul.f32 %v1547, %v1555
        %v1557 = vadd.f32 %v1556, 1.1283791
        %v1558 = vmul.f32 %v812, %v1557
        %v1559 = vmul.f32 %v1547, 3.8918573e-05
        %v1560 = vadd.f32 %v1559, 0.001143296
        %v1561 = vmul.f32 %v1547, %v1560
        %v1562 = vadd.f32 %v1561, 0.014752088
        %v1563 = vmul.f32 %v1547, %v1562
        %v1564 = vadd.f32 %v1563, 0.112945676
        %v1565 = vmul.f32 %v1547, %v1564
        %v1566 = vadd.f32 %v1565, 0.4994258
        %v1567 = vmul.f32 %v1547, %v1566
        %v1568 = vadd.f32 %v1567, 1.0
        %v1569 = vrcp.pop %v1568
        %v1570 = vmul.f32 %v1568, %v1569
        %v1571 = vsub.f32 1.0, %v1570
        %v1572 = vmul.f32 %v1569, %v1571
        %v1573 = vadd.f32 %v1569, %v1572
        %vm1574 = vweird.f32 %v1568
        %vm1575 = vweird.f32 %v1569
        %vm1576 = vmor %vm1574, %vm1575
        %v1577 = vsel %vm1576, %v1569, %v1573
        %v1578 = vand.u32 2147483647, %v1568
        %vm1579 = vcmp.eq.f32.partialorder %v1578, 8.507059e+37
        %v1580 = vand.u32 %v1568, 2147483648
        %v1581 = vor.u32 1.1754944e-38, %v1580
        %v1582 = vsel %vm1579, %v1581, %v1577
        %v1583 = vmul.f32 %v1558, %v1582
        %v1584 = vmin.f32 %v1583, 1.0
        %v1585 = vmax.f32 %v1584, -1.0
        %v1586 = vmul.f32 %v813, %v813
        %v1587 = vmin.f32 16.0, %v1586
        %v1588 = vmul.f32 %v1587, 2.1237322e-06
        %v1589 = vadd.f32 %v1588, 0.00028619796
        %v1590 = vmul.f32 %v1587, %v1589
        %v1591 = vadd.f32 %v1590, 0.0036580483
        %v1592 = vmul.f32 %v1587, %v1591
        %v1593 = vadd.f32 %v1592, 0.05243302
        %v1594 = vmul.f32 %v1587, %v1593
        %v1595 = vadd.f32 %v1594, 0.18741608
        %v1596 = vmul.f32 %v1587, %v1595
        %v1597 = vadd.f32 %v1596, 1.1283791
        %v1598 = vmul.f32 %v813, %v1597
        %v1599 = vmul.f32 %v1587, 3.8918573e-05
        %v1600 = vadd.f32 %v1599, 0.001143296
        %v1601 = vmul.f32 %v1587, %v1600
        %v1602 = vadd.f32 %v1601, 0.014752088
        %v1603 = vmul.f32 %v1587, %v1602
        %v1604 = vadd.f32 %v1603, 0.112945676
        %v1605 = vmul.f32 %v1587, %v1604
        %v1606 = vadd.f32 %v1605, 0.4994258
        %v1607 = vmul.f32 %v1587, %v1606
        %v1608 = vadd.f32 %v1607, 1.0
        %v1609 = vrcp.pop %v1608
        %v1610 = vmul.f32 %v1608, %v1609
        %v1611 = vsub.f32 1.0, %v1610
        %v1612 = vmul.f32 %v1609, %v1611
        %v1613 = vadd.f32 %v1609, %v1612
        %vm1614 = vweird.f32 %v1608
        %vm1615 = vweird.f32 %v1609
        %vm1616 = vmor %vm1614, %vm1615
        %v1617 = vsel %vm1616, %v1609, %v1613
        %v1618 = vand.u32 2147483647, %v1608
        %vm1619 = vcmp.eq.f32.partialorder %v1618, 8.507059e+37
        %v1620 = vand.u32 %v1608, 2147483648
        %v1621 = vor.u32 1.1754944e-38, %v1620
        %v1622 = vsel %vm1619, %v1621, %v1617
        %v1623 = vmul.f32 %v1598, %v1622
        %v1624 = vmin.f32 %v1623, 1.0
        %v1625 = vmax.f32 %v1624, -1.0
        %v1626 = vmul.f32 %v814, %v814
        %v1627 = vmin.f32 16.0, %v1626
        %v1628 = vmul.f32 %v1627, 2.1237322e-06
        %v1629 = vadd.f32 %v1628, 0.00028619796
        %v1630 = vmul.f32 %v1627, %v1629
        %v1631 = vadd.f32 %v1630, 0.0036580483
        %v1632 = vmul.f32 %v1627, %v1631
        %v1633 = vadd.f32 %v1632, 0.05243302
        %v1634 = vmul.f32 %v1627, %v1633
        %v1635 = vadd.f32 %v1634, 0.18741608
        %v1636 = vmul.f32 %v1627, %v1635
        %v1637 = vadd.f32 %v1636, 1.1283791
        %v1638 = vmul.f32 %v814, %v1637
        %v1639 = vmul.f32 %v1627, 3.8918573e-05
        %v1640 = vadd.f32 %v1639, 0.001143296
        %v1641 = vmul.f32 %v1627, %v1640
        %v1642 = vadd.f32 %v1641, 0.014752088
        %v1643 = vmul.f32 %v1627, %v1642
        %v1644 = vadd.f32 %v1643, 0.112945676
        %v1645 = vmul.f32 %v1627, %v1644
        %v1646 = vadd.f32 %v1645, 0.4994258
        %v1647 = vmul.f32 %v1627, %v1646
        %v1648 = vadd.f32 %v1647, 1.0
        %v1649 = vrcp.pop %v1648
        %v1650 = vmul.f32 %v1648, %v1649
        %v1651 = vsub.f32 1.0, %v1650
        %v1652 = vmul.f32 %v1649, %v1651
        %v1653 = vadd.f32 %v1649, %v1652
        %vm1654 = vweird.f32 %v1648
        %vm1655 = vweird.f32 %v1649
        %vm1656 = vmor %vm1654, %vm1655
        %v1657 = vsel %vm1656, %v1649, %v1653
        %v1658 = vand.u32 2147483647, %v1648
        %vm1659 = vcmp.eq.f32.partialorder %v1658, 8.507059e+37
        %v1660 = vand.u32 %v1648, 2147483648
        %v1661 = vor.u32 1.1754944e-38, %v1660
        %v1662 = vsel %vm1659, %v1661, %v1657
        %v1663 = vmul.f32 %v1638, %v1662
        %v1664 = vmin.f32 %v1663, 1.0
        %v1665 = vmax.f32 %v1664, -1.0
        %v1666 = vmul.f32 %v815, %v815
        %v1667 = vmin.f32 16.0, %v1666
        %v1668 = vmul.f32 %v1667, 2.1237322e-06
        %v1669 = vadd.f32 %v1668, 0.00028619796
        %v1670 = vmul.f32 %v1667, %v1669
        %v1671 = vadd.f32 %v1670, 0.0036580483
        %v1672 = vmul.f32 %v1667, %v1671
        %v1673 = vadd.f32 %v1672, 0.05243302
        %v1674 = vmul.f32 %v1667, %v1673
        %v1675 = vadd.f32 %v1674, 0.18741608
        %v1676 = vmul.f32 %v1667, %v1675
        %v1677 = vadd.f32 %v1676, 1.1283791
        %v1678 = vmul.f32 %v815, %v1677
        %v1679 = vmul.f32 %v1667, 3.8918573e-05
        %v1680 = vadd.f32 %v1679, 0.001143296
        %v1681 = vmul.f32 %v1667, %v1680
        %v1682 = vadd.f32 %v1681, 0.014752088
        %v1683 = vmul.f32 %v1667, %v1682
        %v1684 = vadd.f32 %v1683, 0.112945676
        %v1685 = vmul.f32 %v1667, %v1684
        %v1686 = vadd.f32 %v1685, 0.4994258
        %v1687 = vmul.f32 %v1667, %v1686
        %v1688 = vadd.f32 %v1687, 1.0
        %v1689 = vrcp.pop %v1688
        %v1690 = vmul.f32 %v1688, %v1689
        %v1691 = vsub.f32 1.0, %v1690
        %v1692 = vmul.f32 %v1689, %v1691
        %v1693 = vadd.f32 %v1689, %v1692
        %vm1694 = vweird.f32 %v1688
        %vm1695 = vweird.f32 %v1689
        %vm1696 = vmor %vm1694, %vm1695
        %v1697 = vsel %vm1696, %v1689, %v1693
        %v1698 = vand.u32 2147483647, %v1688
        %vm1699 = vcmp.eq.f32.partialorder %v1698, 8.507059e+37
        %v1700 = vand.u32 %v1688, 2147483648
        %v1701 = vor.u32 1.1754944e-38, %v1700
        %v1702 = vsel %vm1699, %v1701, %v1697
        %v1703 = vmul.f32 %v1678, %v1702
        %v1704 = vmin.f32 %v1703, 1.0
        %v1705 = vmax.f32 %v1704, -1.0
        %v1706 = vmul.f32 %v816, %v816
        %v1707 = vmin.f32 16.0, %v1706
        %v1708 = vmul.f32 %v1707, 2.1237322e-06
        %v1709 = vadd.f32 %v1708, 0.00028619796
        %v1710 = vmul.f32 %v1707, %v1709
        %v1711 = vadd.f32 %v1710, 0.0036580483
        %v1712 = vmul.f32 %v1707, %v1711
        %v1713 = vadd.f32 %v1712, 0.05243302
        %v1714 = vmul.f32 %v1707, %v1713
        %v1715 = vadd.f32 %v1714, 0.18741608
        %v1716 = vmul.f32 %v1707, %v1715
        %v1717 = vadd.f32 %v1716, 1.1283791
        %v1718 = vmul.f32 %v816, %v1717
        %v1719 = vmul.f32 %v1707, 3.8918573e-05
        %v1720 = vadd.f32 %v1719, 0.001143296
        %v1721 = vmul.f32 %v1707, %v1720
        %v1722 = vadd.f32 %v1721, 0.014752088
        %v1723 = vmul.f32 %v1707, %v1722
        %v1724 = vadd.f32 %v1723, 0.112945676
        %v1725 = vmul.f32 %v1707, %v1724
        %v1726 = vadd.f32 %v1725, 0.4994258
        %v1727 = vmul.f32 %v1707, %v1726
        %v1728 = vadd.f32 %v1727, 1.0
        %v1729 = vrcp.pop %v1728
        %v1730 = vmul.f32 %v1728, %v1729
        %v1731 = vsub.f32 1.0, %v1730
        %v1732 = vmul.f32 %v1729, %v1731
        %v1733 = vadd.f32 %v1729, %v1732
        %vm1734 = vweird.f32 %v1728
        %vm1735 = vweird.f32 %v1729
        %vm1736 = vmor %vm1734, %vm1735
        %v1737 = vsel %vm1736, %v1729, %v1733
        %v1738 = vand.u32 2147483647, %v1728
        %vm1739 = vcmp.eq.f32.partialorder %v1738, 8.507059e+37
        %v1740 = vand.u32 %v1728, 2147483648
        %v1741 = vor.u32 1.1754944e-38, %v1740
        %v1742 = vsel %vm1739, %v1741, %v1737
        %v1743 = vmul.f32 %v1718, %v1742
        %v1744 = vmin.f32 %v1743, 1.0
        %v1745 = vmax.f32 %v1744, -1.0
        %v1746 = vmul.f32 %v817, %v817
        %v1747 = vmin.f32 16.0, %v1746
        %v1748 = vmul.f32 %v1747, 2.1237322e-06
        %v1749 = vadd.f32 %v1748, 0.00028619796
        %v1750 = vmul.f32 %v1747, %v1749
        %v1751 = vadd.f32 %v1750, 0.0036580483
        %v1752 = vmul.f32 %v1747, %v1751
        %v1753 = vadd.f32 %v1752, 0.05243302
        %v1754 = vmul.f32 %v1747, %v1753
        %v1755 = vadd.f32 %v1754, 0.18741608
        %v1756 = vmul.f32 %v1747, %v1755
        %v1757 = vadd.f32 %v1756, 1.1283791
        %v1758 = vmul.f32 %v817, %v1757
        %v1759 = vmul.f32 %v1747, 3.8918573e-05
        %v1760 = vadd.f32 %v1759, 0.001143296
        %v1761 = vmul.f32 %v1747, %v1760
        %v1762 = vadd.f32 %v1761, 0.014752088
        %v1763 = vmul.f32 %v1747, %v1762
        %v1764 = vadd.f32 %v1763, 0.112945676
        %v1765 = vmul.f32 %v1747, %v1764
        %v1766 = vadd.f32 %v1765, 0.4994258
        %v1767 = vmul.f32 %v1747, %v1766
        %v1768 = vadd.f32 %v1767, 1.0
        %v1769 = vrcp.pop %v1768
        %v1770 = vmul.f32 %v1768, %v1769
        %v1771 = vsub.f32 1.0, %v1770
        %v1772 = vmul.f32 %v1769, %v1771
        %v1773 = vadd.f32 %v1769, %v1772
        %vm1774 = vweird.f32 %v1768
        %vm1775 = vweird.f32 %v1769
        %vm1776 = vmor %vm1774, %vm1775
        %v1777 = vsel %vm1776, %v1769, %v1773
        %v1778 = vand.u32 2147483647, %v1768
        %vm1779 = vcmp.eq.f32.partialorder %v1778, 8.507059e+37
        %v1780 = vand.u32 %v1768, 2147483648
        %v1781 = vor.u32 1.1754944e-38, %v1780
        %v1782 = vsel %vm1779, %v1781, %v1777
        %v1783 = vmul.f32 %v1758, %v1782
        %v1784 = vmin.f32 %v1783, 1.0
        %v1785 = vmax.f32 %v1784, -1.0
        %v1786 = vmul.f32 %v818, %v818
        %v1787 = vmin.f32 16.0, %v1786
        %v1788 = vmul.f32 %v1787, 2.1237322e-06
        %v1789 = vadd.f32 %v1788, 0.00028619796
        %v1790 = vmul.f32 %v1787, %v1789
        %v1791 = vadd.f32 %v1790, 0.0036580483
        %v1792 = vmul.f32 %v1787, %v1791
        %v1793 = vadd.f32 %v1792, 0.05243302
        %v1794 = vmul.f32 %v1787, %v1793
        %v1795 = vadd.f32 %v1794, 0.18741608
        %v1796 = vmul.f32 %v1787, %v1795
        %v1797 = vadd.f32 %v1796, 1.1283791
        %v1798 = vmul.f32 %v818, %v1797
        %v1799 = vmul.f32 %v1787, 3.8918573e-05
        %v1800 = vadd.f32 %v1799, 0.001143296
        %v1801 = vmul.f32 %v1787, %v1800
        %v1802 = vadd.f32 %v1801, 0.014752088
        %v1803 = vmul.f32 %v1787, %v1802
        %v1804 = vadd.f32 %v1803, 0.112945676
        %v1805 = vmul.f32 %v1787, %v1804
        %v1806 = vadd.f32 %v1805, 0.4994258
        %v1807 = vmul.f32 %v1787, %v1806
        %v1808 = vadd.f32 %v1807, 1.0
        %v1809 = vrcp.pop %v1808
        %v1810 = vmul.f32 %v1808, %v1809
        %v1811 = vsub.f32 1.0, %v1810
        %v1812 = vmul.f32 %v1809, %v1811
        %v1813 = vadd.f32 %v1809, %v1812
        %vm1814 = vweird.f32 %v1808
        %vm1815 = vweird.f32 %v1809
        %vm1816 = vmor %vm1814, %vm1815
        %v1817 = vsel %vm1816, %v1809, %v1813
        %v1818 = vand.u32 2147483647, %v1808
        %vm1819 = vcmp.eq.f32.partialorder %v1818, 8.507059e+37
        %v1820 = vand.u32 %v1808, 2147483648
        %v1821 = vor.u32 1.1754944e-38, %v1820
        %v1822 = vsel %vm1819, %v1821, %v1817
        %v1823 = vmul.f32 %v1798, %v1822
        %v1824 = vmin.f32 %v1823, 1.0
        %v1825 = vmax.f32 %v1824, -1.0
        %v1826 = vmul.f32 %v819, %v819
        %v1827 = vmin.f32 16.0, %v1826
        %v1828 = vmul.f32 %v1827, 2.1237322e-06
        %v1829 = vadd.f32 %v1828, 0.00028619796
        %v1830 = vmul.f32 %v1827, %v1829
        %v1831 = vadd.f32 %v1830, 0.0036580483
        %v1832 = vmul.f32 %v1827, %v1831
        %v1833 = vadd.f32 %v1832, 0.05243302
        %v1834 = vmul.f32 %v1827, %v1833
        %v1835 = vadd.f32 %v1834, 0.18741608
        %v1836 = vmul.f32 %v1827, %v1835
        %v1837 = vadd.f32 %v1836, 1.1283791
        %v1838 = vmul.f32 %v819, %v1837
        %v1839 = vmul.f32 %v1827, 3.8918573e-05
        %v1840 = vadd.f32 %v1839, 0.001143296
        %v1841 = vmul.f32 %v1827, %v1840
        %v1842 = vadd.f32 %v1841, 0.014752088
        %v1843 = vmul.f32 %v1827, %v1842
        %v1844 = vadd.f32 %v1843, 0.112945676
        %v1845 = vmul.f32 %v1827, %v1844
        %v1846 = vadd.f32 %v1845, 0.4994258
        %v1847 = vmul.f32 %v1827, %v1846
        %v1848 = vadd.f32 %v1847, 1.0
        %v1849 = vrcp.pop %v1848
        %v1850 = vmul.f32 %v1848, %v1849
        %v1851 = vsub.f32 1.0, %v1850
        %v1852 = vmul.f32 %v1849, %v1851
        %v1853 = vadd.f32 %v1849, %v1852
        %vm1854 = vweird.f32 %v1848
        %vm1855 = vweird.f32 %v1849
        %vm1856 = vmor %vm1854, %vm1855
        %v1857 = vsel %vm1856, %v1849, %v1853
        %v1858 = vand.u32 2147483647, %v1848
        %vm1859 = vcmp.eq.f32.partialorder %v1858, 8.507059e+37
        %v1860 = vand.u32 %v1848, 2147483648
        %v1861 = vor.u32 1.1754944e-38, %v1860
        %v1862 = vsel %vm1859, %v1861, %v1857
        %v1863 = vmul.f32 %v1838, %v1862
        %v1864 = vmin.f32 %v1863, 1.0
        %v1865 = vmax.f32 %v1864, -1.0
        %v1866 = vmul.f32 %v820, %v820
        %v1867 = vmin.f32 16.0, %v1866
        %v1868 = vmul.f32 %v1867, 2.1237322e-06
        %v1869 = vadd.f32 %v1868, 0.00028619796
        %v1870 = vmul.f32 %v1867, %v1869
        %v1871 = vadd.f32 %v1870, 0.0036580483
        %v1872 = vmul.f32 %v1867, %v1871
        %v1873 = vadd.f32 %v1872, 0.05243302
        %v1874 = vmul.f32 %v1867, %v1873
        %v1875 = vadd.f32 %v1874, 0.18741608
        %v1876 = vmul.f32 %v1867, %v1875
        %v1877 = vadd.f32 %v1876, 1.1283791
        %v1878 = vmul.f32 %v820, %v1877
        %v1879 = vmul.f32 %v1867, 3.8918573e-05
        %v1880 = vadd.f32 %v1879, 0.001143296
        %v1881 = vmul.f32 %v1867, %v1880
        %v1882 = vadd.f32 %v1881, 0.014752088
        %v1883 = vmul.f32 %v1867, %v1882
        %v1884 = vadd.f32 %v1883, 0.112945676
        %v1885 = vmul.f32 %v1867, %v1884
        %v1886 = vadd.f32 %v1885, 0.4994258
        %v1887 = vmul.f32 %v1867, %v1886
        %v1888 = vadd.f32 %v1887, 1.0
        %v1889 = vrcp.pop %v1888
        %v1890 = vmul.f32 %v1888, %v1889
        %v1891 = vsub.f32 1.0, %v1890
        %v1892 = vmul.f32 %v1889, %v1891
        %v1893 = vadd.f32 %v1889, %v1892
        %vm1894 = vweird.f32 %v1888
        %vm1895 = vweird.f32 %v1889
        %vm1896 = vmor %vm1894, %vm1895
        %v1897 = vsel %vm1896, %v1889, %v1893
        %v1898 = vand.u32 2147483647, %v1888
        %vm1899 = vcmp.eq.f32.partialorder %v1898, 8.507059e+37
        %v1900 = vand.u32 %v1888, 2147483648
        %v1901 = vor.u32 1.1754944e-38, %v1900
        %v1902 = vsel %vm1899, %v1901, %v1897
        %v1903 = vmul.f32 %v1878, %v1902
        %v1904 = vmin.f32 %v1903, 1.0
        %v1905 = vmax.f32 %v1904, -1.0
        %v1906 = vmul.f32 %v821, %v821
        %v1907 = vmin.f32 16.0, %v1906
        %v1908 = vmul.f32 %v1907, 2.1237322e-06
        %v1909 = vadd.f32 %v1908, 0.00028619796
        %v1910 = vmul.f32 %v1907, %v1909
        %v1911 = vadd.f32 %v1910, 0.0036580483
        %v1912 = vmul.f32 %v1907, %v1911
        %v1913 = vadd.f32 %v1912, 0.05243302
        %v1914 = vmul.f32 %v1907, %v1913
        %v1915 = vadd.f32 %v1914, 0.18741608
        %v1916 = vmul.f32 %v1907, %v1915
        %v1917 = vadd.f32 %v1916, 1.1283791
        %v1918 = vmul.f32 %v821, %v1917
        %v1919 = vmul.f32 %v1907, 3.8918573e-05
        %v1920 = vadd.f32 %v1919, 0.001143296
        %v1921 = vmul.f32 %v1907, %v1920
        %v1922 = vadd.f32 %v1921, 0.014752088
        %v1923 = vmul.f32 %v1907, %v1922
        %v1924 = vadd.f32 %v1923, 0.112945676
        %v1925 = vmul.f32 %v1907, %v1924
        %v1926 = vadd.f32 %v1925, 0.4994258
        %v1927 = vmul.f32 %v1907, %v1926
        %v1928 = vadd.f32 %v1927, 1.0
        %v1929 = vrcp.pop %v1928
        %v1930 = vmul.f32 %v1928, %v1929
        %v1931 = vsub.f32 1.0, %v1930
        %v1932 = vmul.f32 %v1929, %v1931
        %v1933 = vadd.f32 %v1929, %v1932
        %vm1934 = vweird.f32 %v1928
        %vm1935 = vweird.f32 %v1929
        %vm1936 = vmor %vm1934, %vm1935
        %v1937 = vsel %vm1936, %v1929, %v1933
        %v1938 = vand.u32 2147483647, %v1928
        %vm1939 = vcmp.eq.f32.partialorder %v1938, 8.507059e+37
        %v1940 = vand.u32 %v1928, 2147483648
        %v1941 = vor.u32 1.1754944e-38, %v1940
        %v1942 = vsel %vm1939, %v1941, %v1937
        %v1943 = vmul.f32 %v1918, %v1942
        %v1944 = vmin.f32 %v1943, 1.0
        %v1945 = vmax.f32 %v1944, -1.0
        %v1946 = vmul.f32 %v822, %v822
        %v1947 = vmin.f32 16.0, %v1946
        %v1948 = vmul.f32 %v1947, 2.1237322e-06
        %v1949 = vadd.f32 %v1948, 0.00028619796
        %v1950 = vmul.f32 %v1947, %v1949
        %v1951 = vadd.f32 %v1950, 0.0036580483
        %v1952 = vmul.f32 %v1947, %v1951
        %v1953 = vadd.f32 %v1952, 0.05243302
        %v1954 = vmul.f32 %v1947, %v1953
        %v1955 = vadd.f32 %v1954, 0.18741608
        %v1956 = vmul.f32 %v1947, %v1955
        %v1957 = vadd.f32 %v1956, 1.1283791
        %v1958 = vmul.f32 %v822, %v1957
        %v1959 = vmul.f32 %v1947, 3.8918573e-05
        %v1960 = vadd.f32 %v1959, 0.001143296
        %v1961 = vmul.f32 %v1947, %v1960
        %v1962 = vadd.f32 %v1961, 0.014752088
        %v1963 = vmul.f32 %v1947, %v1962
        %v1964 = vadd.f32 %v1963, 0.112945676
        %v1965 = vmul.f32 %v1947, %v1964
        %v1966 = vadd.f32 %v1965, 0.4994258
        %v1967 = vmul.f32 %v1947, %v1966
        %v1968 = vadd.f32 %v1967, 1.0
        %v1969 = vrcp.pop %v1968
        %v1970 = vmul.f32 %v1968, %v1969
        %v1971 = vsub.f32 1.0, %v1970
        %v1972 = vmul.f32 %v1969, %v1971
        %v1973 = vadd.f32 %v1969, %v1972
        %vm1974 = vweird.f32 %v1968
        %vm1975 = vweird.f32 %v1969
        %vm1976 = vmor %vm1974, %vm1975
        %v1977 = vsel %vm1976, %v1969, %v1973
        %v1978 = vand.u32 2147483647, %v1968
        %vm1979 = vcmp.eq.f32.partialorder %v1978, 8.507059e+37
        %v1980 = vand.u32 %v1968, 2147483648
        %v1981 = vor.u32 1.1754944e-38, %v1980
        %v1982 = vsel %vm1979, %v1981, %v1977
        %v1983 = vmul.f32 %v1958, %v1982
        %v1984 = vmin.f32 %v1983, 1.0
        %v1985 = vmax.f32 %v1984, -1.0
        %v1986 = vmul.f32 %v823, %v823
        %v1987 = vmin.f32 16.0, %v1986
        %v1988 = vmul.f32 %v1987, 2.1237322e-06
        %v1989 = vadd.f32 %v1988, 0.00028619796
        %v1990 = vmul.f32 %v1987, %v1989
        %v1991 = vadd.f32 %v1990, 0.0036580483
        %v1992 = vmul.f32 %v1987, %v1991
        %v1993 = vadd.f32 %v1992, 0.05243302
        %v1994 = vmul.f32 %v1987, %v1993
        %v1995 = vadd.f32 %v1994, 0.18741608
        %v1996 = vmul.f32 %v1987, %v1995
        %v1997 = vadd.f32 %v1996, 1.1283791
        %v1998 = vmul.f32 %v823, %v1997
        %v1999 = vmul.f32 %v1987, 3.8918573e-05
        %v2000 = vadd.f32 %v1999, 0.001143296
        %v2001 = vmul.f32 %v1987, %v2000
        %v2002 = vadd.f32 %v2001, 0.014752088
        %v2003 = vmul.f32 %v1987, %v2002
        %v2004 = vadd.f32 %v2003, 0.112945676
        %v2005 = vmul.f32 %v1987, %v2004
        %v2006 = vadd.f32 %v2005, 0.4994258
        %v2007 = vmul.f32 %v1987, %v2006
        %v2008 = vadd.f32 %v2007, 1.0
        %v2009 = vrcp.pop %v2008
        %v2010 = vmul.f32 %v2008, %v2009
        %v2011 = vsub.f32 1.0, %v2010
        %v2012 = vmul.f32 %v2009, %v2011
        %v2013 = vadd.f32 %v2009, %v2012
        %vm2014 = vweird.f32 %v2008
        %vm2015 = vweird.f32 %v2009
        %vm2016 = vmor %vm2014, %vm2015
        %v2017 = vsel %vm2016, %v2009, %v2013
        %v2018 = vand.u32 2147483647, %v2008
        %vm2019 = vcmp.eq.f32.partialorder %v2018, 8.507059e+37
        %v2020 = vand.u32 %v2008, 2147483648
        %v2021 = vor.u32 1.1754944e-38, %v2020
        %v2022 = vsel %vm2019, %v2021, %v2017
        %v2023 = vmul.f32 %v1998, %v2022
        %v2024 = vmin.f32 %v2023, 1.0
        %v2025 = vmax.f32 %v2024, -1.0
        %v2026 = vmul.f32 %v824, %v824
        %v2027 = vmin.f32 16.0, %v2026
        %v2028 = vmul.f32 %v2027, 2.1237322e-06
        %v2029 = vadd.f32 %v2028, 0.00028619796
        %v2030 = vmul.f32 %v2027, %v2029
        %v2031 = vadd.f32 %v2030, 0.0036580483
        %v2032 = vmul.f32 %v2027, %v2031
        %v2033 = vadd.f32 %v2032, 0.05243302
        %v2034 = vmul.f32 %v2027, %v2033
        %v2035 = vadd.f32 %v2034, 0.18741608
        %v2036 = vmul.f32 %v2027, %v2035
        %v2037 = vadd.f32 %v2036, 1.1283791
        %v2038 = vmul.f32 %v824, %v2037
        %v2039 = vmul.f32 %v2027, 3.8918573e-05
        %v2040 = vadd.f32 %v2039, 0.001143296
        %v2041 = vmul.f32 %v2027, %v2040
        %v2042 = vadd.f32 %v2041, 0.014752088
        %v2043 = vmul.f32 %v2027, %v2042
        %v2044 = vadd.f32 %v2043, 0.112945676
        %v2045 = vmul.f32 %v2027, %v2044
        %v2046 = vadd.f32 %v2045, 0.4994258
        %v2047 = vmul.f32 %v2027, %v2046
        %v2048 = vadd.f32 %v2047, 1.0
        %v2049 = vrcp.pop %v2048
        %v2050 = vmul.f32 %v2048, %v2049
        %v2051 = vsub.f32 1.0, %v2050
        %v2052 = vmul.f32 %v2049, %v2051
        %v2053 = vadd.f32 %v2049, %v2052
        %vm2054 = vweird.f32 %v2048
        %vm2055 = vweird.f32 %v2049
        %vm2056 = vmor %vm2054, %vm2055
        %v2057 = vsel %vm2056, %v2049, %v2053
        %v2058 = vand.u32 2147483647, %v2048
        %vm2059 = vcmp.eq.f32.partialorder %v2058, 8.507059e+37
        %v2060 = vand.u32 %v2048, 2147483648
        %v2061 = vor.u32 1.1754944e-38, %v2060
        %v2062 = vsel %vm2059, %v2061, %v2057
        %v2063 = vmul.f32 %v2038, %v2062
        %v2064 = vmin.f32 %v2063, 1.0
        %v2065 = vmax.f32 %v2064, -1.0
        %v2066 = vmul.f32 %v825, %v825
        %v2067 = vmin.f32 16.0, %v2066
        %v2068 = vmul.f32 %v2067, 2.1237322e-06
        %v2069 = vadd.f32 %v2068, 0.00028619796
        %v2070 = vmul.f32 %v2067, %v2069
        %v2071 = vadd.f32 %v2070, 0.0036580483
        %v2072 = vmul.f32 %v2067, %v2071
        %v2073 = vadd.f32 %v2072, 0.05243302
        %v2074 = vmul.f32 %v2067, %v2073
        %v2075 = vadd.f32 %v2074, 0.18741608
        %v2076 = vmul.f32 %v2067, %v2075
        %v2077 = vadd.f32 %v2076, 1.1283791
        %v2078 = vmul.f32 %v825, %v2077
        %v2079 = vmul.f32 %v2067, 3.8918573e-05
        %v2080 = vadd.f32 %v2079, 0.001143296
        %v2081 = vmul.f32 %v2067, %v2080
        %v2082 = vadd.f32 %v2081, 0.014752088
        %v2083 = vmul.f32 %v2067, %v2082
        %v2084 = vadd.f32 %v2083, 0.112945676
        %v2085 = vmul.f32 %v2067, %v2084
        %v2086 = vadd.f32 %v2085, 0.4994258
        %v2087 = vmul.f32 %v2067, %v2086
        %v2088 = vadd.f32 %v2087, 1.0
        %v2089 = vrcp.pop %v2088
        %v2090 = vmul.f32 %v2088, %v2089
        %v2091 = vsub.f32 1.0, %v2090
        %v2092 = vmul.f32 %v2089, %v2091
        %v2093 = vadd.f32 %v2089, %v2092
        %vm2094 = vweird.f32 %v2088
        %vm2095 = vweird.f32 %v2089
        %vm2096 = vmor %vm2094, %vm2095
        %v2097 = vsel %vm2096, %v2089, %v2093
        %v2098 = vand.u32 2147483647, %v2088
        %vm2099 = vcmp.eq.f32.partialorder %v2098, 8.507059e+37
        %v2100 = vand.u32 %v2088, 2147483648
        %v2101 = vor.u32 1.1754944e-38, %v2100
        %v2102 = vsel %vm2099, %v2101, %v2097
        %v2103 = vmul.f32 %v2078, %v2102
        %v2104 = vmin.f32 %v2103, 1.0
        %v2105 = vmax.f32 %v2104, -1.0
        %v2106 = vadd.f32 %v865, 1.0
        %v2107 = vadd.f32 %v905, 1.0
        %v2108 = vadd.f32 %v945, 1.0
        %v2109 = vadd.f32 %v985, 1.0
        %v2110 = vadd.f32 %v1025, 1.0
        %v2111 = vadd.f32 %v1065, 1.0
        %v2112 = vadd.f32 %v1105, 1.0
        %v2113 = vadd.f32 %v1145, 1.0
        %v2114 = vadd.f32 %v1185, 1.0
        %v2115 = vadd.f32 %v1225, 1.0
        %v2116 = vadd.f32 %v1265, 1.0
        %v2117 = vadd.f32 %v1305, 1.0
        %v2118 = vadd.f32 %v1345, 1.0
        %v2119 = vadd.f32 %v1385, 1.0
        %v2120 = vadd.f32 %v1425, 1.0
        %v2121 = vadd.f32 %v1465, 1.0
        %v2122 = vadd.f32 %v1505, 1.0
        %v2123 = vadd.f32 %v1545, 1.0
        %v2124 = vadd.f32 %v1585, 1.0
        %v2125 = vadd.f32 %v1625, 1.0
        %v2126 = vadd.f32 %v1665, 1.0
        %v2127 = vadd.f32 %v1705, 1.0
        %v2128 = vadd.f32 %v1745, 1.0
        %v2129 = vadd.f32 %v1785, 1.0
        %v2130 = vadd.f32 %v1825, 1.0
        %v2131 = vadd.f32 %v1865, 1.0
        %v2132 = vadd.f32 %v1905, 1.0
        %v2133 = vadd.f32 %v1945, 1.0
        %v2134 = vadd.f32 %v1985, 1.0
        %v2135 = vadd.f32 %v2025, 1.0
        %v2136 = vadd.f32 %v2065, 1.0
        %v2137 = vadd.f32 %v2105, 1.0
        %v2138 = vmul.f32 %v762, %v2106
        %v2139 = vmul.f32 %v763, %v2107
        %v2140 = vmul.f32 %v764, %v2108
        %v2141 = vmul.f32 %v765, %v2109
        %v2142 = vmul.f32 %v766, %v2110
        %v2143 = vmul.f32 %v767, %v2111
        %v2144 = vmul.f32 %v768, %v2112
        %v2145 = vmul.f32 %v769, %v2113
        %v2146 = vmul.f32 %v770, %v2114
        %v2147 = vmul.f32 %v771, %v2115
        %v2148 = vmul.f32 %v772, %v2116
        %v2149 = vmul.f32 %v773, %v2117
        %v2150 = vmul.f32 %v774, %v2118
        %v2151 = vmul.f32 %v775, %v2119
        %v2152 = vmul.f32 %v776, %v2120
        %v2153 = vmul.f32 %v777, %v2121
        %v2154 = vmul.f32 %v778, %v2122
        %v2155 = vmul.f32 %v779, %v2123
        %v2156 = vmul.f32 %v780, %v2124
        %v2157 = vmul.f32 %v781, %v2125
        %v2158 = vmul.f32 %v782, %v2126
        %v2159 = vmul.f32 %v783, %v2127
        %v2160 = vmul.f32 %v784, %v2128
        %v2161 = vmul.f32 %v785, %v2129
        %v2162 = vmul.f32 %v786, %v2130
        %v2163 = vmul.f32 %v787, %v2131
        %v2164 = vmul.f32 %v788, %v2132
        %v2165 = vmul.f32 %v789, %v2133
        %v2166 = vmul.f32 %v790, %v2134
        %v2167 = vmul.f32 %v791, %v2135
        %v2168 = vmul.f32 %v792, %v2136
        %v2169 = vmul.f32 %v793, %v2137
        %2170 = vst [vmem:[%s266] sm:$0xff] %v2138
        %2171 = vst [vmem:[%s266 + $0x8] sm:$0xff] %v2139
        %2172 = vst [vmem:[%s266 + $0x10] sm:$0xff] %v2140
        %2173 = vst [vmem:[%s266 + $0x18] sm:$0xff] %v2141
        %2174 = vst [vmem:[%s266 + $0x20] sm:$0xff] %v2142
        %2175 = vst [vmem:[%s266 + $0x28] sm:$0xff] %v2143
        %2176 = vst [vmem:[%s266 + $0x30] sm:$0xff] %v2144
        %2177 = vst [vmem:[%s266 + $0x38] sm:$0xff] %v2145
        %2178 = vst [vmem:[%s266 + $0x40] sm:$0xff] %v2146
        %2179 = vst [vmem:[%s266 + $0x48] sm:$0xff] %v2147
        %2180 = vst [vmem:[%s266 + $0x50] sm:$0xff] %v2148
        %2181 = vst [vmem:[%s266 + $0x58] sm:$0xff] %v2149
        %2182 = vst [vmem:[%s266 + $0x60] sm:$0xff] %v2150
        %2183 = vst [vmem:[%s266 + $0x68] sm:$0xff] %v2151
        %2184 = vst [vmem:[%s266 + $0x70] sm:$0xff] %v2152
        %2185 = vst [vmem:[%s266 + $0x78] sm:$0xff] %v2153
        %2186 = vst [vmem:[%s266 + $0x80] sm:$0xff] %v2154
        %2187 = vst [vmem:[%s266 + $0x88] sm:$0xff] %v2155
        %2188 = vst [vmem:[%s266 + $0x90] sm:$0xff] %v2156
        %2189 = vst [vmem:[%s266 + $0x98] sm:$0xff] %v2157
        %2190 = vst [vmem:[%s266 + $0xa0] sm:$0xff] %v2158
        %2191 = vst [vmem:[%s266 + $0xa8] sm:$0xff] %v2159
        %2192 = vst [vmem:[%s266 + $0xb0] sm:$0xff] %v2160
        %2193 = vst [vmem:[%s266 + $0xb8] sm:$0xff] %v2161
        %2194 = vst [vmem:[%s266 + $0xc0] sm:$0xff] %v2162
        %2195 = vst [vmem:[%s266 + $0xc8] sm:$0xff] %v2163
        %2196 = vst [vmem:[%s266 + $0xd0] sm:$0xff] %v2164
        %2197 = vst [vmem:[%s266 + $0xd8] sm:$0xff] %v2165
        %2198 = vst [vmem:[%s266 + $0xe0] sm:$0xff] %v2166
        %2199 = vst [vmem:[%s266 + $0xe8] sm:$0xff] %v2167
        %2200 = vst [vmem:[%s266 + $0xf0] sm:$0xff] %v2168
        %2201 = vst [vmem:[%s266 + $0xf8] sm:$0xff] %v2169
        %s2202 = sand.u32 %s121, 1
        %s2203 = scalar_lea.sflag [#allocation4], %s2202
        %s2204 = sand.u32 %s121, 1
        %s2205 = smul.addr %s2204, 256
        %s2206 = scalar_lea.vmem [#allocation8], %s2205
        // Predicated region
        $region45: #{tpu_custom_call.1} parent=31 // pred_check
          %p2207 = pneg %p131
        $region46: #{tpu_custom_call.1} parent=31 // pred_check_branch
          %2209 = sbr.rel (%p2207) target = $region48
        $region47: #{tpu_custom_call.1} parent=31 // pred_region
          %s2210 = smul.u32 16, %s25
          %s2211 = smul.u32 2, %s26
          %2213 = vsyncadd %s2203, 0
          %s2214 = smul.addr %s2210, 4
          %s2215 = sadd.s32 %s2211, %s2214
          %s2216 = smul.addr %s2215, 8
          %s2217 = scalar_lea.hbm %s3, %s2216
          %s2218 = sshll.u32 %s2206, 4
          %s2219 = int_to_ptr.vmem [resolvable:$true] %s2218
          %s2220 = sshll.u32 %s2217, 4
          %s2221 = int_to_ptr.hbm [resolvable:$true] %s2220
          %2226 = dma.vmem_to_hbm [thread:$0]  %s2219, 4096, %s2221, %s2203, 256, 512, 16
        $region48: #{tpu_custom_call.1} parent=31 // pred_fallthru
          _
      $region32: #{tpu_custom_call.1} parent=5 // pred_fallthru
        _
      %p2227 = scmp.le.s32.totalorder 2, %s16
      // Predicated region
      $region49: #{tpu_custom_call.1} parent=5 // pred_check
        %p2228 = pneg %p2227
      $region50: #{tpu_custom_call.1} parent=5 // pred_check_branch
        %2230 = sbr.rel (%p2228) target = $region52
      $region51: #{tpu_custom_call.1} parent=5 // pred_region
        %s2231 = ssub.s32 %s16, 2
        // Predicated region
        $region53: #{tpu_custom_call.1} parent=51 // pred_check
          %p2232 = pneg %p137
        $region54: #{tpu_custom_call.1} parent=51 // pred_check_branch
          %2234 = sbr.rel (%p2232) target = $region56
        $region55: #{tpu_custom_call.1} parent=51 // pred_region
          %s2235 = sand.u32 %s122, 1
          %s2236 = scalar_lea.sflag [#allocation4], %s2235
          %s2237 = sand.u32 %s122, 1
          %s2238 = smul.addr %s2237, 256
          %s2239 = scalar_lea.vmem [#allocation8], %s2238
          %2241 = dma.done %s2236, 4096
        $region56: #{tpu_custom_call.1} parent=51 // pred_fallthru
          _
      $region52: #{tpu_custom_call.1} parent=5 // pred_fallthru
        _
    $region6: #{tpu_custom_call.1} parent=1 // loop_footer
      %s20 = sadd.s32 1, %s16
    $region7: #{tpu_custom_call.1} parent=1 // loop_footer_branch
      %15 = sbr.rel target = $region3
    $region8: #{tpu_custom_call.1} parent=1 // loop_exit
      _
    %2242 = vsyncpa [#allocation3], 1
    %s2243 = scalar_lea.sflag [#allocation3], 1
    %2244 = vsyncpa %s2243, 1
    %2245 = vsyncpa [#allocation6], 1
    %s2246 = scalar_lea.sflag [#allocation6], 1
    %2247 = vsyncpa %s2246, 1
    %2248 = vsyncpa [#allocation4], 1
    %s2249 = scalar_lea.sflag [#allocation4], 1
    %2250 = vsyncpa %s2249, 1

</llo_original>
